<compile_context>
chip_gen: v7x
topology: tpu7x:2x2x1
jax: 0.10.0
libtpu: 0.0.40
codegen_flags: <defaults>
</compile_context>

<pallas_src>
import functools

import jax
import jax.numpy as jnp
from jax.experimental import pallas as pl
from jax.experimental.pallas import tpu as pltpu


_LANE = 128
_CONV_TILE_M = 512        # pixels per conv tile (well under v7x 64 MiB VMEM)
_LPIPS_TILE_M = 1024      # pixels per LPIPS reduction tile
_VMEM_LIMIT = 32 * 1024 * 1024


def _round_up(x, m):
    return ((x + m - 1) // m) * m


# ----------------------------------------------------------------------------
# Pallas kernels
# ----------------------------------------------------------------------------
def _conv_mm_relu_kernel(p_ref, w_ref, b_ref, o_ref):
    # (TILE_M, K) bf16 patch tile @ (K, CPAD) bf16 weights on the MXU with f32
    # accumulation; bias + ReLU in f32; lane-dense (CPAD % 128 == 0) store.
    acc = jnp.dot(p_ref[...], w_ref[...], preferred_element_type=jnp.float32)
    acc = acc + b_ref[...]
    o_ref[...] = jnp.maximum(acc, 0.0).astype(o_ref.dtype)


def _lpips_level_kernel(fx_ref, fy_ref, o_ref, acc_ref, *, inv_count):
    # Tiled over M = B*H*W.  Per-pixel L2 norm over channels, eps-normalize,
    # |diff|, partial sums accumulated in SMEM across grid steps; finalized
    # with the GLOBAL element count (not the block shape).  Zero-padded rows
    # have zero norm -> normalized to 0 -> contribute nothing.
    i = pl.program_id(0)

    @pl.when(i == 0)
    def _():
        acc_ref[0] = jnp.float32(0.0)

    fx = fx_ref[...].astype(jnp.float32)
    fy = fy_ref[...].astype(jnp.float32)
    nx = jnp.sqrt(jnp.sum(fx * fx, axis=-1, keepdims=True))
    ny = jnp.sqrt(jnp.sum(fy * fy, axis=-1, keepdims=True))
    # NOTE: pl.reciprocal(..., approx=True) would move these divides to the EUP
    # slot; kept exact so the tight 1e-5 check against the reference holds.
    fxn = fx / (nx + 1e-10)
    fyn = fy / (ny + 1e-10)
    acc_ref[0] += jnp.sum(jnp.abs(fxn - fyn))

    @pl.when(i == pl.num_programs(0) - 1)
    def _():
        o_ref[0, 0] = acc_ref[0] * inv_count


# ----------------------------------------------------------------------------
# Wrappers (glue: padding, im2col slicing, reshapes)
# ----------------------------------------------------------------------------
def _im2col_3x3_s2(x_nhwc):
    """3x3 / stride 2 / pad 1 patch extraction -> [B*Ho*Wo, 9*Cin]."""
    B, H, W, Cin = x_nhwc.shape
    Ho, Wo = H // 2, W // 2
    xp = jnp.pad(x_nhwc, ((0, 0), (1, 1), (1, 1), (0, 0)))
    patches = []
    for dh in range(3):
        for dw in range(3):
            patches.append(xp[:, dh:dh + 2 * Ho:2, dw:dw + 2 * Wo:2, :])
    p = jnp.concatenate(patches, axis=-1)          # [B, Ho, Wo, 9*Cin]
    return p.reshape(B * Ho * Wo, 9 * Cin), (B, Ho, Wo)


def _conv3x3_s2_relu_pair(x_nhwc, y_nhwc, w, b):
    """One gridded Pallas conv matmul for BOTH images (stacked along M)."""
    Cin = x_nhwc.shape[-1]
    Cout = w.shape[-1]
    cpad = _round_up(Cout, _LANE)

    px, (B, Ho, Wo) = _im2col_3x3_s2(x_nhwc)
    py, _ = _im2col_3x3_s2(y_nhwc)
    m = px.shape[0]
    k = px.shape[1]

    p = jnp.concatenate([px, py], axis=0)                       # [2M, K]
    m_tot = 2 * m
    tile_m = min(_CONV_TILE_M, _round_up(m_tot, 16))            # 16: bf16 sublane pack
    m_pad = _round_up(m_tot, tile_m)
    if m_pad != m_tot:
        p = jnp.pad(p, ((0, m_pad - m_tot), (0, 0)))
    p = p.astype(jnp.bfloat16)

    w2d = w.reshape(9 * Cin, Cout)
    w2d = jnp.pad(w2d, ((0, 0), (0, cpad - Cout))).astype(jnp.bfloat16)
    b2d = jnp.pad(b.reshape(1, Cout), ((0, 0), (0, cpad - Cout))).astype(jnp.float32)

    out = pl.pallas_call(
        _conv_mm_relu_kernel,
        out_shape=jax.ShapeDtypeStruct((m_pad, cpad), jnp.float32),
        grid=(m_pad // tile_m,),
        in_specs=[
            pl.BlockSpec((tile_m, k), lambda i: (i, 0)),
            pl.BlockSpec((k, cpad), lambda i: (0, 0)),
            pl.BlockSpec((1, cpad), lambda i: (0, 0)),
        ],
        out_specs=pl.BlockSpec((tile_m, cpad), lambda i: (i, 0)),
        compiler_params=pltpu.CompilerParams(
            dimension_semantics=("parallel",),
            vmem_limit_bytes=_VMEM_LIMIT,
        ),
    )(p, w2d, b2d)

    fx = out[:m, :Cout].reshape(B, Ho, Wo, Cout)
    fy = out[m:m_tot, :Cout].reshape(B, Ho, Wo, Cout)
    return fx, fy


def _lpips_level(fx_nhwc, fy_nhwc):
    """Tiled reduction kernel producing one scalar for a feature level."""
    B, H, W, C = fx_nhwc.shape
    m = B * H * W
    fx2 = fx_nhwc.reshape(m, C)
    fy2 = fy_nhwc.reshape(m, C)

    tile_m = min(_LPIPS_TILE_M, _round_up(m, 8))
    m_pad = _round_up(m, tile_m)
    if m_pad != m:
        fx2 = jnp.pad(fx2, ((0, m_pad - m), (0, 0)))
        fy2 = jnp.pad(fy2, ((0, m_pad - m), (0, 0)))

    kernel = functools.partial(_lpips_level_kernel, inv_count=1.0 / float(m * C))
    out = pl.pallas_call(
        kernel,
        out_shape=jax.ShapeDtypeStruct((1, 1), jnp.float32),
        grid=(m_pad // tile_m,),
        in_specs=[
            pl.BlockSpec((tile_m, C), lambda i: (i, 0)),
            pl.BlockSpec((tile_m, C), lambda i: (i, 0)),
        ],
        out_specs=pl.BlockSpec((1, 1), lambda i: (0, 0),
                               memory_space=pltpu.MemorySpace.SMEM),
        scratch_shapes=[pltpu.SMEM((1,), jnp.float32)],
        compiler_params=pltpu.CompilerParams(
            dimension_semantics=("arbitrary",),     # grid-accumulated output
            vmem_limit_bytes=_VMEM_LIMIT,
        ),
    )(fx2, fy2)
    return out[0, 0]


def init_feature_net_params(key, in_ch=3, widths=(16, 32, 64)):
    """Deterministic synthetic backbone weights (3x3 convs)."""
    params = []
    cin = in_ch
    for cout in widths:
        key, kw, kb = jax.random.split(key, 3)
        scale = jnp.sqrt(2.0 / (9.0 * cin))
        w = scale * jax.random.normal(kw, (3, 3, cin, cout), jnp.float32)
        b = 0.01 * jax.random.normal(kb, (cout,), jnp.float32)
        params.append((w, b))
        cin = cout
    return params


def lpips_forward(x_nchw, y_nchw, params, level_weights):
    """LPIPS(x, y) with the synthetic feature pyramid.  Inputs are NCHW."""
    x = jnp.transpose(x_nchw, (0, 2, 3, 1)).astype(jnp.float32)  # -> NHWC
    y = jnp.transpose(y_nchw, (0, 2, 3, 1)).astype(jnp.float32)
    fx, fy = x, y
    loss = jnp.float32(0.0)
    for i, (w, b) in enumerate(params):
        fx, fy = _conv3x3_s2_relu_pair(fx, fy, w, b)
        loss = loss + jnp.float32(level_weights[i]) * _lpips_level(fx, fy)
    return loss


# ----------------------------------------------------------------------------
# Plain-JAX reference (correctness check only; same bf16 matmul operands)
# ----------------------------------------------------------------------------
def _lpips_reference(x_nchw, y_nchw, params, level_weights):
    def conv(x, w, b):
        p, (B, Ho, Wo) = _im2col_3x3_s2(x)
        w2d = w.reshape(-1, w.shape[-1])
        o = jnp.dot(p.astype(jnp.bfloat16), w2d.astype(jnp.bfloat16),
                    preferred_element_type=jnp.float32) + b
        return jnp.maximum(o, 0.0).reshape(B, Ho, Wo, w.shape[-1])

    x = jnp.transpose(x_nchw, (0, 2, 3, 1)).astype(jnp.float32)
    y = jnp.transpose(y_nchw, (0, 2, 3, 1)).astype(jnp.float32)
    fx, fy = x, y
    loss = jnp.float32(0.0)
    for i, (w, b) in enumerate(params):
        fx = conv(fx, w, b)
        fy = conv(fy, w, b)
        nx = jnp.linalg.norm(fx, axis=-1, keepdims=True)
        ny = jnp.linalg.norm(fy, axis=-1, keepdims=True)
        l1 = jnp.mean(jnp.abs(fx / (nx + 1e-10) - fy / (ny + 1e-10)))
        loss = loss + jnp.float32(level_weights[i]) * l1
    return loss


# ----------------------------------------------------------------------------
if __name__ == "__main__":
    key = jax.random.PRNGKey(0)
    k_params, kx, ky = jax.random.split(key, 3)

    B, C, H, W = 2, 3, 16, 16
    x = jax.random.normal(kx, (B, C, H, W), jnp.float32)
    y = jax.random.normal(ky, (B, C, H, W), jnp.float32)

    params = init_feature_net_params(k_params, in_ch=C, widths=(16, 32, 64))
    # weights = [(channels_len - i) * 0.1 for i in range(channels_len)]
    n_levels = len(params)
    level_weights = [(n_levels - i) * 0.1 for i in range(n_levels)]

    loss = jax.jit(lambda a, b: lpips_forward(a, b, params, level_weights))(x, y)
    loss = jax.block_until_ready(loss)

    ref = _lpips_reference(x, y, params, level_weights)
    assert jnp.allclose(loss, ref, rtol=1e-5, atol=1e-5), (loss, ref)

    print("KERNEL_OK")
</pallas_src>

<mosaic_0001>
module attributes {stable_mosaic.version = 11 : i64} {
  func.func @_conv_mm_relu_kernel(%arg0: i32, %arg1: memref<256x27xbf16, #tpu.memory_space<vmem>>, %arg2: memref<27x128xbf16, #tpu.memory_space<vmem>>, %arg3: memref<1x128xf32, #tpu.memory_space<vmem>>, %arg4: memref<256x128xf32, #tpu.memory_space<vmem>>) attributes {dimension_semantics = [#tpu.dimension_semantics<parallel>], iteration_bounds = array<i64: 1>, scalar_prefetch = 0 : i64, scratch_operands = 0 : i64, tpu.core_type = #tpu.core_type<tc>, window_params = [{transform_indices = @transform_0, window_bounds = array<i64: 256, 27>}, {pipeline_mode = #tpu.pipeline_mode<synchronous>, transform_indices = @transform_1, window_bounds = array<i64: 27, 128>}, {pipeline_mode = #tpu.pipeline_mode<synchronous>, transform_indices = @transform_2, window_bounds = array<i64: 1, 128>}, {transform_indices = @transform_3, window_bounds = array<i64: 256, 128>}]} {
    %c0 = arith.constant 0 : index
    %c0_0 = arith.constant 0 : index
    %0 = vector.load %arg1[%c0, %c0_0] : memref<256x27xbf16, #tpu.memory_space<vmem>>, vector<256x27xbf16>
    %c0_1 = arith.constant 0 : index
    %c0_2 = arith.constant 0 : index
    %1 = vector.load %arg2[%c0_1, %c0_2] : memref<27x128xbf16, #tpu.memory_space<vmem>>, vector<27x128xbf16>
    %cst = arith.constant dense<0.000000e+00> : vector<256x128xf32>
    %2 = tpu.matmul %0, %1, %cst {dimension_numbers = #tpu.dot_dimension_numbers<[1], [0], [0], [1], [0, 0, 1, 1], [], []>} : vector<256x27xbf16>, vector<27x128xbf16>, vector<256x128xf32> -> vector<256x128xf32>
    %c0_3 = arith.constant 0 : index
    %c0_4 = arith.constant 0 : index
    %3 = vector.load %arg3[%c0_3, %c0_4] : memref<1x128xf32, #tpu.memory_space<vmem>>, vector<1x128xf32>
    %4 = vector.broadcast %3 : vector<1x128xf32> to vector<256x128xf32>
    %5 = arith.addf %2, %4 : vector<256x128xf32>
    %cst_5 = arith.constant 0.000000e+00 : f32
    %6 = vector.broadcast %cst_5 : f32 to vector<256x128xf32>
    %7 = arith.maximumf %5, %6 : vector<256x128xf32>
    %c0_6 = arith.constant 0 : index
    %c0_7 = arith.constant 0 : index
    %8 = vector.load %arg4[%c0_6, %c0_7] : memref<256x128xf32, #tpu.memory_space<vmem>>, vector<256x128xf32>
    tpu.vector_store %arg4[%c0_6, %c0_7], %7 {strides = array<i32>} : memref<256x128xf32, #tpu.memory_space<vmem>>, vector<256x128xf32>,
    return
  }
  func.func @transform_0(%arg0: i32) -> (i32, i32) {
    %c0_i32 = arith.constant 0 : i32
    %c0_i32_0 = arith.constant 0 : i32
    return %arg0, %c0_i32 : i32, i32
  }
  func.func @transform_1(%arg0: i32) -> (i32, i32) {
    %c0_i32 = arith.constant 0 : i32
    %c0_i32_0 = arith.constant 0 : i32
    %c0_i32_1 = arith.constant 0 : i32
    return %c0_i32, %c0_i32_0 : i32, i32
  }
  func.func @transform_2(%arg0: i32) -> (i32, i32) {
    %c0_i32 = arith.constant 0 : i32
    %c0_i32_0 = arith.constant 0 : i32
    %c0_i32_1 = arith.constant 0 : i32
    return %c0_i32, %c0_i32_0 : i32, i32
  }
  func.func @transform_3(%arg0: i32) -> (i32, i32) {
    %c0_i32 = arith.constant 0 : i32
    %c0_i32_0 = arith.constant 0 : i32
    return %arg0, %c0_i32 : i32, i32
  }
}

module attributes {stable_mosaic.version = 11 : i64} {
  func.func @_lpips_level_kernel(%arg0: i32, %arg1: memref<128x16xf32, #tpu.memory_space<vmem>>, %arg2: memref<128x16xf32, #tpu.memory_space<vmem>>, %arg3: memref<1x1xf32, #tpu.memory_space<smem>>, %arg4: memref<1xf32, #tpu.memory_space<smem>>) attributes {dimension_semantics = [#tpu.dimension_semantics<arbitrary>], iteration_bounds = array<i64: 1>, scalar_prefetch = 0 : i64, scratch_operands = 1 : i64, tpu.core_type = #tpu.core_type<tc>, window_params = [{transform_indices = @transform_0, window_bounds = array<i64: 128, 16>}, {transform_indices = @transform_1, window_bounds = array<i64: 128, 16>}, {transform_indices = @transform_2, window_bounds = array<i64: 1, 1>}]} {
    %c0_i32 = arith.constant 0 : i32
    %0 = arith.cmpi eq, %arg0, %c0_i32 : i32
    %1 = arith.extui %0 : i1 to i32
    %c0_i32_0 = arith.constant 0 : i32
    %2 = arith.cmpi ne, %1, %c0_i32_0 : i32
    scf.if %2 {
      %cst_12 = arith.constant 0.000000e+00 : f32
      %c0_13 = arith.constant 0 : index
      %33 = memref.load %arg4[%c0_13] : memref<1xf32, #tpu.memory_space<smem>>
      memref.store %cst_12, %arg4[%c0_13] : memref<1xf32, #tpu.memory_space<smem>>
    } else {
    }
    %c0 = arith.constant 0 : index
    %c0_1 = arith.constant 0 : index
    %3 = vector.load %arg1[%c0, %c0_1] : memref<128x16xf32, #tpu.memory_space<vmem>>, vector<128x16xf32>
    %c0_2 = arith.constant 0 : index
    %c0_3 = arith.constant 0 : index
    %4 = vector.load %arg2[%c0_2, %c0_3] : memref<128x16xf32, #tpu.memory_space<vmem>>, vector<128x16xf32>
    %5 = arith.mulf %3, %3 : vector<128x16xf32>
    %cst = arith.constant dense<0.000000e+00> : vector<128xf32>
    %6 = vector.multi_reduction <add>, %5, %cst [1] : vector<128x16xf32> to vector<128xf32>
    %7 = vector.shape_cast %6 : vector<128xf32> to vector<128x1xf32>
    %8 = math.sqrt %7 : vector<128x1xf32>
    %9 = arith.mulf %4, %4 : vector<128x16xf32>
    %cst_4 = arith.constant dense<0.000000e+00> : vector<128xf32>
    %10 = vector.multi_reduction <add>, %9, %cst_4 [1] : vector<128x16xf32> to vector<128xf32>
    %11 = vector.shape_cast %10 : vector<128xf32> to vector<128x1xf32>
    %12 = math.sqrt %11 : vector<128x1xf32>
    %cst_5 = arith.constant 1.000000e-10 : f32
    %13 = vector.broadcast %cst_5 : f32 to vector<128x1xf32>
    %14 = arith.addf %8, %13 : vector<128x1xf32>
    %15 = vector.broadcast %14 : vector<128x1xf32> to vector<128x16xf32>
    %16 = arith.divf %3, %15 : vector<128x16xf32>
    %cst_6 = arith.constant 1.000000e-10 : f32
    %17 = vector.broadcast %cst_6 : f32 to vector<128x1xf32>
    %18 = arith.addf %12, %17 : vector<128x1xf32>
    %19 = vector.broadcast %18 : vector<128x1xf32> to vector<128x16xf32>
    %20 = arith.divf %4, %19 : vector<128x16xf32>
    %c0_7 = arith.constant 0 : index
    %21 = memref.load %arg4[%c0_7] : memref<1xf32, #tpu.memory_space<smem>>
    %22 = arith.subf %16, %20 : vector<128x16xf32>
    %23 = math.absf %22 : vector<128x16xf32>
    %24 = vector.shape_cast %23 : vector<128x16xf32> to vector<1x128x16xf32>
    %cst_8 = arith.constant dense<0.000000e+00> : vector<1xf32>
    %25 = vector.multi_reduction <add>, %24, %cst_8 [1, 2] : vector<1x128x16xf32> to vector<1xf32>
    %26 = vector.shape_cast %25 : vector<1xf32> to vector<1x1x1xf32>
    %27 = vector.extract %26[0, 0, 0] : f32 from vector<1x1x1xf32>
    %28 = arith.addf %21, %27 : f32
    %c0_9 = arith.constant 0 : index
    %29 = memref.load %arg4[%c0_9] : memref<1xf32, #tpu.memory_space<smem>>
    memref.store %28, %arg4[%c0_9] : memref<1xf32, #tpu.memory_space<smem>>
    %c0_i32_10 = arith.constant 0 : i32
    %30 = arith.cmpi eq, %arg0, %c0_i32_10 : i32
    %31 = arith.extui %30 : i1 to i32
    %c0_i32_11 = arith.constant 0 : i32
    %32 = arith.cmpi ne, %31, %c0_i32_11 : i32
    scf.if %32 {
      %c0_12 = arith.constant 0 : index
      %33 = memref.load %arg4[%c0_12] : memref<1xf32, #tpu.memory_space<smem>>
      %cst_13 = arith.constant 4.8828125E-4 : f32
      %34 = arith.mulf %33, %cst_13 : f32
      %c0_14 = arith.constant 0 : index
      %c0_15 = arith.constant 0 : index
      %35 = memref.load %arg3[%c0_14, %c0_15] : memref<1x1xf32, #tpu.memory_space<smem>>
      memref.store %34, %arg3[%c0_14, %c0_15] : memref<1x1xf32, #tpu.memory_space<smem>>
    } else {
    }
    return
  }
  func.func @transform_0(%arg0: i32) -> (i32, i32) {
    %c0_i32 = arith.constant 0 : i32
    %c0_i32_0 = arith.constant 0 : i32
    return %arg0, %c0_i32 : i32, i32
  }
  func.func @transform_1(%arg0: i32) -> (i32, i32) {
    %c0_i32 = arith.constant 0 : i32
    %c0_i32_0 = arith.constant 0 : i32
    return %arg0, %c0_i32 : i32, i32
  }
  func.func @transform_2(%arg0: i32) -> (i32, i32) {
    %c0_i32 = arith.constant 0 : i32
    %c0_i32_0 = arith.constant 0 : i32
    %c0_i32_1 = arith.constant 0 : i32
    return %c0_i32, %c0_i32_0 : i32, i32
  }
}

module attributes {stable_mosaic.version = 11 : i64} {
  func.func @_conv_mm_relu_kernel(%arg0: i32, %arg1: memref<64x144xbf16, #tpu.memory_space<vmem>>, %arg2: memref<144x128xbf16, #tpu.memory_space<vmem>>, %arg3: memref<1x128xf32, #tpu.memory_space<vmem>>, %arg4: memref<64x128xf32, #tpu.memory_space<vmem>>) attributes {dimension_semantics = [#tpu.dimension_semantics<parallel>], iteration_bounds = array<i64: 1>, scalar_prefetch = 0 : i64, scratch_operands = 0 : i64, tpu.core_type = #tpu.core_type<tc>, window_params = [{transform_indices = @transform_0, window_bounds = array<i64: 64, 144>}, {pipeline_mode = #tpu.pipeline_mode<synchronous>, transform_indices = @transform_1, window_bounds = array<i64: 144, 128>}, {pipeline_mode = #tpu.pipeline_mode<synchronous>, transform_indices = @transform_2, window_bounds = array<i64: 1, 128>}, {transform_indices = @transform_3, window_bounds = array<i64: 64, 128>}]} {
    %c0 = arith.constant 0 : index
    %c0_0 = arith.constant 0 : index
    %0 = vector.load %arg1[%c0, %c0_0] : memref<64x144xbf16, #tpu.memory_space<vmem>>, vector<64x144xbf16>
    %c0_1 = arith.constant 0 : index
    %c0_2 = arith.constant 0 : index
    %1 = vector.load %arg2[%c0_1, %c0_2] : memref<144x128xbf16, #tpu.memory_space<vmem>>, vector<144x128xbf16>
    %cst = arith.constant dense<0.000000e+00> : vector<64x128xf32>
    %2 = tpu.matmul %0, %1, %cst {dimension_numbers = #tpu.dot_dimension_numbers<[1], [0], [0], [1], [0, 0, 1, 1], [], []>} : vector<64x144xbf16>, vector<144x128xbf16>, vector<64x128xf32> -> vector<64x128xf32>
    %c0_3 = arith.constant 0 : index
    %c0_4 = arith.constant 0 : index
    %3 = vector.load %arg3[%c0_3, %c0_4] : memref<1x128xf32, #tpu.memory_space<vmem>>, vector<1x128xf32>
    %4 = vector.broadcast %3 : vector<1x128xf32> to vector<64x128xf32>
    %5 = arith.addf %2, %4 : vector<64x128xf32>
    %cst_5 = arith.constant 0.000000e+00 : f32
    %6 = vector.broadcast %cst_5 : f32 to vector<64x128xf32>
    %7 = arith.maximumf %5, %6 : vector<64x128xf32>
    %c0_6 = arith.constant 0 : index
    %c0_7 = arith.constant 0 : index
    %8 = vector.load %arg4[%c0_6, %c0_7] : memref<64x128xf32, #tpu.memory_space<vmem>>, vector<64x128xf32>
    tpu.vector_store %arg4[%c0_6, %c0_7], %7 {strides = array<i32>} : memref<64x128xf32, #tpu.memory_space<vmem>>, vector<64x128xf32>,
    return
  }
  func.func @transform_0(%arg0: i32) -> (i32, i32) {
    %c0_i32 = arith.constant 0 : i32
    %c0_i32_0 = arith.constant 0 : i32
    return %arg0, %c0_i32 : i32, i32
  }
  func.func @transform_1(%arg0: i32) -> (i32, i32) {
    %c0_i32 = arith.constant 0 : i32
    %c0_i32_0 = arith.constant 0 : i32
    %c0_i32_1 = arith.constant 0 : i32
    return %c0_i32, %c0_i32_0 : i32, i32
  }
  func.func @transform_2(%arg0: i32) -> (i32, i32) {
    %c0_i32 = arith.constant 0 : i32
    %c0_i32_0 = arith.constant 0 : i32
    %c0_i32_1 = arith.constant 0 : i32
    return %c0_i32, %c0_i32_0 : i32, i32
  }
  func.func @transform_3(%arg0: i32) -> (i32, i32) {
    %c0_i32 = arith.constant 0 : i32
    %c0_i32_0 = arith.constant 0 : i32
    return %arg0, %c0_i32 : i32, i32
  }
}

module attributes {stable_mosaic.version = 11 : i64} {
  func.func @_lpips_level_kernel(%arg0: i32, %arg1: memref<32x32xf32, #tpu.memory_space<vmem>>, %arg2: memref<32x32xf32, #tpu.memory_space<vmem>>, %arg3: memref<1x1xf32, #tpu.memory_space<smem>>, %arg4: memref<1xf32, #tpu.memory_space<smem>>) attributes {dimension_semantics = [#tpu.dimension_semantics<arbitrary>], iteration_bounds = array<i64: 1>, scalar_prefetch = 0 : i64, scratch_operands = 1 : i64, tpu.core_type = #tpu.core_type<tc>, window_params = [{transform_indices = @transform_0, window_bounds = array<i64: 32, 32>}, {transform_indices = @transform_1, window_bounds = array<i64: 32, 32>}, {transform_indices = @transform_2, window_bounds = array<i64: 1, 1>}]} {
    %c0_i32 = arith.constant 0 : i32
    %0 = arith.cmpi eq, %arg0, %c0_i32 : i32
    %1 = arith.extui %0 : i1 to i32
    %c0_i32_0 = arith.constant 0 : i32
    %2 = arith.cmpi ne, %1, %c0_i32_0 : i32
    scf.if %2 {
      %cst_12 = arith.constant 0.000000e+00 : f32
      %c0_13 = arith.constant 0 : index
      %33 = memref.load %arg4[%c0_13] : memref<1xf32, #tpu.memory_space<smem>>
      memref.store %cst_12, %arg4[%c0_13] : memref<1xf32, #tpu.memory_space<smem>>
    } else {
    }
    %c0 = arith.constant 0 : index
    %c0_1 = arith.constant 0 : index
    %3 = vector.load %arg1[%c0, %c0_1] : memref<32x32xf32, #tpu.memory_space<vmem>>, vector<32x32xf32>
    %c0_2 = arith.constant 0 : index
    %c0_3 = arith.constant 0 : index
    %4 = vector.load %arg2[%c0_2, %c0_3] : memref<32x32xf32, #tpu.memory_space<vmem>>, vector<32x32xf32>
    %5 = arith.mulf %3, %3 : vector<32x32xf32>
    %cst = arith.constant dense<0.000000e+00> : vector<32xf32>
    %6 = vector.multi_reduction <add>, %5, %cst [1] : vector<32x32xf32> to vector<32xf32>
    %7 = vector.shape_cast %6 : vector<32xf32> to vector<32x1xf32>
    %8 = math.sqrt %7 : vector<32x1xf32>
    %9 = arith.mulf %4, %4 : vector<32x32xf32>
    %cst_4 = arith.constant dense<0.000000e+00> : vector<32xf32>
    %10 = vector.multi_reduction <add>, %9, %cst_4 [1] : vector<32x32xf32> to vector<32xf32>
    %11 = vector.shape_cast %10 : vector<32xf32> to vector<32x1xf32>
    %12 = math.sqrt %11 : vector<32x1xf32>
    %cst_5 = arith.constant 1.000000e-10 : f32
    %13 = vector.broadcast %cst_5 : f32 to vector<32x1xf32>
    %14 = arith.addf %8, %13 : vector<32x1xf32>
    %15 = vector.broadcast %14 : vector<32x1xf32> to vector<32x32xf32>
    %16 = arith.divf %3, %15 : vector<32x32xf32>
    %cst_6 = arith.constant 1.000000e-10 : f32
    %17 = vector.broadcast %cst_6 : f32 to vector<32x1xf32>
    %18 = arith.addf %12, %17 : vector<32x1xf32>
    %19 = vector.broadcast %18 : vector<32x1xf32> to vector<32x32xf32>
    %20 = arith.divf %4, %19 : vector<32x32xf32>
    %c0_7 = arith.constant 0 : index
    %21 = memref.load %arg4[%c0_7] : memref<1xf32, #tpu.memory_space<smem>>
    %22 = arith.subf %16, %20 : vector<32x32xf32>
    %23 = math.absf %22 : vector<32x32xf32>
    %24 = vector.shape_cast %23 : vector<32x32xf32> to vector<1x32x32xf32>
    %cst_8 = arith.constant dense<0.000000e+00> : vector<1xf32>
    %25 = vector.multi_reduction <add>, %24, %cst_8 [1, 2] : vector<1x32x32xf32> to vector<1xf32>
    %26 = vector.shape_cast %25 : vector<1xf32> to vector<1x1x1xf32>
    %27 = vector.extract %26[0, 0, 0] : f32 from vector<1x1x1xf32>
    %28 = arith.addf %21, %27 : f32
    %c0_9 = arith.constant 0 : index
    %29 = memref.load %arg4[%c0_9] : memref<1xf32, #tpu.memory_space<smem>>
    memref.store %28, %arg4[%c0_9] : memref<1xf32, #tpu.memory_space<smem>>
    %c0_i32_10 = arith.constant 0 : i32
    %30 = arith.cmpi eq, %arg0, %c0_i32_10 : i32
    %31 = arith.extui %30 : i1 to i32
    %c0_i32_11 = arith.constant 0 : i32
    %32 = arith.cmpi ne, %31, %c0_i32_11 : i32
    scf.if %32 {
      %c0_12 = arith.constant 0 : index
      %33 = memref.load %arg4[%c0_12] : memref<1xf32, #tpu.memory_space<smem>>
      %cst_13 = arith.constant 9.765625E-4 : f32
      %34 = arith.mulf %33, %cst_13 : f32
      %c0_14 = arith.constant 0 : index
      %c0_15 = arith.constant 0 : index
      %35 = memref.load %arg3[%c0_14, %c0_15] : memref<1x1xf32, #tpu.memory_space<smem>>
      memref.store %34, %arg3[%c0_14, %c0_15] : memref<1x1xf32, #tpu.memory_space<smem>>
    } else {
    }
    return
  }
  func.func @transform_0(%arg0: i32) -> (i32, i32) {
    %c0_i32 = arith.constant 0 : i32
    %c0_i32_0 = arith.constant 0 : i32
    return %arg0, %c0_i32 : i32, i32
  }
  func.func @transform_1(%arg0: i32) -> (i32, i32) {
    %c0_i32 = arith.constant 0 : i32
    %c0_i32_0 = arith.constant 0 : i32
    return %arg0, %c0_i32 : i32, i32
  }
  func.func @transform_2(%arg0: i32) -> (i32, i32) {
    %c0_i32 = arith.constant 0 : i32
    %c0_i32_0 = arith.constant 0 : i32
    %c0_i32_1 = arith.constant 0 : i32
    return %c0_i32, %c0_i32_0 : i32, i32
  }
}

module attributes {stable_mosaic.version = 11 : i64} {
  func.func @_lpips_level_kernel(%arg0: i32, %arg1: memref<8x64xf32, #tpu.memory_space<vmem>>, %arg2: memref<8x64xf32, #tpu.memory_space<vmem>>, %arg3: memref<1x1xf32, #tpu.memory_space<smem>>, %arg4: memref<1xf32, #tpu.memory_space<smem>>) attributes {dimension_semantics = [#tpu.dimension_semantics<arbitrary>], iteration_bounds = array<i64: 1>, scalar_prefetch = 0 : i64, scratch_operands = 1 : i64, tpu.core_type = #tpu.core_type<tc>, window_params = [{transform_indices = @transform_0, window_bounds = array<i64: 8, 64>}, {transform_indices = @transform_1, window_bounds = array<i64: 8, 64>}, {transform_indices = @transform_2, window_bounds = array<i64: 1, 1>}]} {
    %c0_i32 = arith.constant 0 : i32
    %0 = arith.cmpi eq, %arg0, %c0_i32 : i32
    %1 = arith.extui %0 : i1 to i32
    %c0_i32_0 = arith.constant 0 : i32
    %2 = arith.cmpi ne, %1, %c0_i32_0 : i32
    scf.if %2 {
      %cst_12 = arith.constant 0.000000e+00 : f32
      %c0_13 = arith.constant 0 : index
      %33 = memref.load %arg4[%c0_13] : memref<1xf32, #tpu.memory_space<smem>>
      memref.store %cst_12, %arg4[%c0_13] : memref<1xf32, #tpu.memory_space<smem>>
    } else {
    }
    %c0 = arith.constant 0 : index
    %c0_1 = arith.constant 0 : index
    %3 = vector.load %arg1[%c0, %c0_1] : memref<8x64xf32, #tpu.memory_space<vmem>>, vector<8x64xf32>
    %c0_2 = arith.constant 0 : index
    %c0_3 = arith.constant 0 : index
    %4 = vector.load %arg2[%c0_2, %c0_3] : memref<8x64xf32, #tpu.memory_space<vmem>>, vector<8x64xf32>
    %5 = arith.mulf %3, %3 : vector<8x64xf32>
    %cst = arith.constant dense<0.000000e+00> : vector<8xf32>
    %6 = vector.multi_reduction <add>, %5, %cst [1] : vector<8x64xf32> to vector<8xf32>
    %7 = vector.shape_cast %6 : vector<8xf32> to vector<8x1xf32>
    %8 = math.sqrt %7 : vector<8x1xf32>
    %9 = arith.mulf %4, %4 : vector<8x64xf32>
    %cst_4 = arith.constant dense<0.000000e+00> : vector<8xf32>
    %10 = vector.multi_reduction <add>, %9, %cst_4 [1] : vector<8x64xf32> to vector<8xf32>
    %11 = vector.shape_cast %10 : vector<8xf32> to vector<8x1xf32>
    %12 = math.sqrt %11 : vector<8x1xf32>
    %cst_5 = arith.constant 1.000000e-10 : f32
    %13 = vector.broadcast %cst_5 : f32 to vector<8x1xf32>
    %14 = arith.addf %8, %13 : vector<8x1xf32>
    %15 = vector.broadcast %14 : vector<8x1xf32> to vector<8x64xf32>
    %16 = arith.divf %3, %15 : vector<8x64xf32>
    %cst_6 = arith.constant 1.000000e-10 : f32
    %17 = vector.broadcast %cst_6 : f32 to vector<8x1xf32>
    %18 = arith.addf %12, %17 : vector<8x1xf32>
    %19 = vector.broadcast %18 : vector<8x1xf32> to vector<8x64xf32>
    %20 = arith.divf %4, %19 : vector<8x64xf32>
    %c0_7 = arith.constant 0 : index
    %21 = memref.load %arg4[%c0_7] : memref<1xf32, #tpu.memory_space<smem>>
    %22 = arith.subf %16, %20 : vector<8x64xf32>
    %23 = math.absf %22 : vector<8x64xf32>
    %24 = vector.shape_cast %23 : vector<8x64xf32> to vector<1x8x64xf32>
    %cst_8 = arith.constant dense<0.000000e+00> : vector<1xf32>
    %25 = vector.multi_reduction <add>, %24, %cst_8 [1, 2] : vector<1x8x64xf32> to vector<1xf32>
    %26 = vector.shape_cast %25 : vector<1xf32> to vector<1x1x1xf32>
    %27 = vector.extract %26[0, 0, 0] : f32 from vector<1x1x1xf32>
    %28 = arith.addf %21, %27 : f32
    %c0_9 = arith.constant 0 : index
    %29 = memref.load %arg4[%c0_9] : memref<1xf32, #tpu.memory_space<smem>>
    memref.store %28, %arg4[%c0_9] : memref<1xf32, #tpu.memory_space<smem>>
    %c0_i32_10 = arith.constant 0 : i32
    %30 = arith.cmpi eq, %arg0, %c0_i32_10 : i32
    %31 = arith.extui %30 : i1 to i32
    %c0_i32_11 = arith.constant 0 : i32
    %32 = arith.cmpi ne, %31, %c0_i32_11 : i32
    scf.if %32 {
      %c0_12 = arith.constant 0 : index
      %33 = memref.load %arg4[%c0_12] : memref<1xf32, #tpu.memory_space<smem>>
      %cst_13 = arith.constant 0.001953125 : f32
      %34 = arith.mulf %33, %cst_13 : f32
      %c0_14 = arith.constant 0 : index
      %c0_15 = arith.constant 0 : index
      %35 = memref.load %arg3[%c0_14, %c0_15] : memref<1x1xf32, #tpu.memory_space<smem>>
      memref.store %34, %arg3[%c0_14, %c0_15] : memref<1x1xf32, #tpu.memory_space<smem>>
    } else {
    }
    return
  }
  func.func @transform_0(%arg0: i32) -> (i32, i32) {
    %c0_i32 = arith.constant 0 : i32
    %c0_i32_0 = arith.constant 0 : i32
    return %arg0, %c0_i32 : i32, i32
  }
  func.func @transform_1(%arg0: i32) -> (i32, i32) {
    %c0_i32 = arith.constant 0 : i32
    %c0_i32_0 = arith.constant 0 : i32
    return %arg0, %c0_i32 : i32, i32
  }
  func.func @transform_2(%arg0: i32) -> (i32, i32) {
    %c0_i32 = arith.constant 0 : i32
    %c0_i32_0 = arith.constant 0 : i32
    %c0_i32_1 = arith.constant 0 : i32
    return %c0_i32, %c0_i32_0 : i32, i32
  }
}

module attributes {stable_mosaic.version = 11 : i64} {
  func.func @_conv_mm_relu_kernel(%arg0: i32, %arg1: memref<16x288xbf16, #tpu.memory_space<vmem>>, %arg2: memref<288x128xbf16, #tpu.memory_space<vmem>>, %arg3: memref<1x128xf32, #tpu.memory_space<vmem>>, %arg4: memref<16x128xf32, #tpu.memory_space<vmem>>) attributes {dimension_semantics = [#tpu.dimension_semantics<parallel>], iteration_bounds = array<i64: 1>, scalar_prefetch = 0 : i64, scratch_operands = 0 : i64, tpu.core_type = #tpu.core_type<tc>, window_params = [{transform_indices = @transform_0, window_bounds = array<i64: 16, 288>}, {pipeline_mode = #tpu.pipeline_mode<synchronous>, transform_indices = @transform_1, window_bounds = array<i64: 288, 128>}, {pipeline_mode = #tpu.pipeline_mode<synchronous>, transform_indices = @transform_2, window_bounds = array<i64: 1, 128>}, {transform_indices = @transform_3, window_bounds = array<i64: 16, 128>}]} {
    %c0 = arith.constant 0 : index
    %c0_0 = arith.constant 0 : index
    %0 = vector.load %arg1[%c0, %c0_0] : memref<16x288xbf16, #tpu.memory_space<vmem>>, vector<16x288xbf16>
    %c0_1 = arith.constant 0 : index
    %c0_2 = arith.constant 0 : index
    %1 = vector.load %arg2[%c0_1, %c0_2] : memref<288x128xbf16, #tpu.memory_space<vmem>>, vector<288x128xbf16>
    %cst = arith.constant dense<0.000000e+00> : vector<16x128xf32>
    %2 = tpu.matmul %0, %1, %cst {dimension_numbers = #tpu.dot_dimension_numbers<[1], [0], [0], [1], [0, 0, 1, 1], [], []>} : vector<16x288xbf16>, vector<288x128xbf16>, vector<16x128xf32> -> vector<16x128xf32>
    %c0_3 = arith.constant 0 : index
    %c0_4 = arith.constant 0 : index
    %3 = vector.load %arg3[%c0_3, %c0_4] : memref<1x128xf32, #tpu.memory_space<vmem>>, vector<1x128xf32>
    %4 = vector.broadcast %3 : vector<1x128xf32> to vector<16x128xf32>
    %5 = arith.addf %2, %4 : vector<16x128xf32>
    %cst_5 = arith.constant 0.000000e+00 : f32
    %6 = vector.broadcast %cst_5 : f32 to vector<16x128xf32>
    %7 = arith.maximumf %5, %6 : vector<16x128xf32>
    %c0_6 = arith.constant 0 : index
    %c0_7 = arith.constant 0 : index
    %8 = vector.load %arg4[%c0_6, %c0_7] : memref<16x128xf32, #tpu.memory_space<vmem>>, vector<16x128xf32>
    tpu.vector_store %arg4[%c0_6, %c0_7], %7 {strides = array<i32>} : memref<16x128xf32, #tpu.memory_space<vmem>>, vector<16x128xf32>,
    return
  }
  func.func @transform_0(%arg0: i32) -> (i32, i32) {
    %c0_i32 = arith.constant 0 : i32
    %c0_i32_0 = arith.constant 0 : i32
    return %arg0, %c0_i32 : i32, i32
  }
  func.func @transform_1(%arg0: i32) -> (i32, i32) {
    %c0_i32 = arith.constant 0 : i32
    %c0_i32_0 = arith.constant 0 : i32
    %c0_i32_1 = arith.constant 0 : i32
    return %c0_i32, %c0_i32_0 : i32, i32
  }
  func.func @transform_2(%arg0: i32) -> (i32, i32) {
    %c0_i32 = arith.constant 0 : i32
    %c0_i32_0 = arith.constant 0 : i32
    %c0_i32_1 = arith.constant 0 : i32
    return %c0_i32, %c0_i32_0 : i32, i32
  }
  func.func @transform_3(%arg0: i32) -> (i32, i32) {
    %c0_i32 = arith.constant 0 : i32
    %c0_i32_0 = arith.constant 0 : i32
    return %arg0, %c0_i32 : i32, i32
  }
}

</mosaic_0001>

<llo_original>
// kernel: _lambda_.7
$region0: #{_lambda_.7}
  #allocation0 [shape = 'u32[]', space=smem, size = 0x4, offset = 0x4, fixed_abs, tag = 'smem constant byte address 0x4 - core index']
  #allocation1 [shape = 'u32[144,128]{1,0:T(1,128)}', space=vmem, size = 0x12000, scoped, tag = 'internal scratch']
  #allocation2 [shape = 'f32[1]{0:T(128)}', space=smem, size = 0x200, scoped, tag = 'scratch operand']
  %s0 = inlined_call_operand.vmem [shape: f32[128,16], index: 0, kind: input, shape index: {}]
  %s1 = inlined_call_operand.vmem [shape: f32[128,16], index: 1, kind: input, shape index: {}]
  %s2 = inlined_call_operand.hbm [shape: f32[1,1], index: 2, kind: output, shape index: {}]
  %s3 = sld [smem:[#allocation0]]
  $region26: #{_lambda_.7} parent=0
    _
  %s5 = ssub.s32 1, %s3
  %s6 = scalar_select 0, %s5, %s3
  $region1: #{_lambda_.7} parent=0
    #allocation3 [shape = 'u8[512]{0}', space=smem, size = 0x200, scoped, tag = 'output window, operand 0, single buffered']
    #allocation4 [shape = 's32[1]{0}', space=sflag, size = 0x4, scoped, tag = 'scoped memory for _lambda_.7']
    %7 = vsyncpa [#allocation4], 0
    // Predicated region
    $region2: #{_lambda_.7} parent=1 // pred_check
      _
    $region3: #{_lambda_.7} parent=1 // pred_check_branch
      %9 = sbr.rel (0) target = $region5
    $region4: #{_lambda_.7} parent=1 // pred_region
      _
    $region5: #{_lambda_.7} parent=1 // pred_fallthru
      _
    // Predicated region
    $region6: #{_lambda_.7} parent=1 // pred_check
      _
    $region7: #{_lambda_.7} parent=1 // pred_check_branch
      %11 = sbr.rel (0) target = $region9
    $region8: #{_lambda_.7} parent=1 // pred_region
      _
    $region9: #{_lambda_.7} parent=1 // pred_fallthru
      _
    %p12 = scmp.eq.s32.totalorder 0, 0
    // Predicated region
    $region10: #{_lambda_.7} parent=1 // pred_check
      %p13 = pneg %p12
    $region11: #{_lambda_.7} parent=1 // pred_check_branch
      %15 = sbr.rel (%p13) target = $region13
    $region12: #{_lambda_.7} parent=1 // pred_region
      %s16 = scalar_lea.smem [#allocation2], 0
      %17 = sst [smem:[%s16]] 0.0
    $region13: #{_lambda_.7} parent=1 // pred_fallthru
      _
    %v18 = vld [vmem:[%s0] sm:$0xff]
    %v19 = vld [vmem:[%s0 + $0x8] sm:$0xff]
    %v20 = vld [vmem:[%s0 + $0x10] sm:$0xff]
    %v21 = vld [vmem:[%s0 + $0x18] sm:$0xff]
    %v22 = vld [vmem:[%s0 + $0x20] sm:$0xff]
    %v23 = vld [vmem:[%s0 + $0x28] sm:$0xff]
    %v24 = vld [vmem:[%s0 + $0x30] sm:$0xff]
    %v25 = vld [vmem:[%s0 + $0x38] sm:$0xff]
    %v26 = vld [vmem:[%s0 + $0x40] sm:$0xff]
    %v27 = vld [vmem:[%s0 + $0x48] sm:$0xff]
    %v28 = vld [vmem:[%s0 + $0x50] sm:$0xff]
    %v29 = vld [vmem:[%s0 + $0x58] sm:$0xff]
    %v30 = vld [vmem:[%s0 + $0x60] sm:$0xff]
    %v31 = vld [vmem:[%s0 + $0x68] sm:$0xff]
    %v32 = vld [vmem:[%s0 + $0x70] sm:$0xff]
    %v33 = vld [vmem:[%s0 + $0x78] sm:$0xff]
    %v34 = vld [vmem:[%s1] sm:$0xff]
    %v35 = vld [vmem:[%s1 + $0x8] sm:$0xff]
    %v36 = vld [vmem:[%s1 + $0x10] sm:$0xff]
    %v37 = vld [vmem:[%s1 + $0x18] sm:$0xff]
    %v38 = vld [vmem:[%s1 + $0x20] sm:$0xff]
    %v39 = vld [vmem:[%s1 + $0x28] sm:$0xff]
    %v40 = vld [vmem:[%s1 + $0x30] sm:$0xff]
    %v41 = vld [vmem:[%s1 + $0x38] sm:$0xff]
    %v42 = vld [vmem:[%s1 + $0x40] sm:$0xff]
    %v43 = vld [vmem:[%s1 + $0x48] sm:$0xff]
    %v44 = vld [vmem:[%s1 + $0x50] sm:$0xff]
    %v45 = vld [vmem:[%s1 + $0x58] sm:$0xff]
    %v46 = vld [vmem:[%s1 + $0x60] sm:$0xff]
    %v47 = vld [vmem:[%s1 + $0x68] sm:$0xff]
    %v48 = vld [vmem:[%s1 + $0x70] sm:$0xff]
    %v49 = vld [vmem:[%s1 + $0x78] sm:$0xff]
    %v50 = vmul.f32 %v18, %v18
    %v51 = vmul.f32 %v19, %v19
    %v52 = vmul.f32 %v20, %v20
    %v53 = vmul.f32 %v21, %v21
    %v54 = vmul.f32 %v22, %v22
    %v55 = vmul.f32 %v23, %v23
    %v56 = vmul.f32 %v24, %v24
    %v57 = vmul.f32 %v25, %v25
    %v58 = vmul.f32 %v26, %v26
    %v59 = vmul.f32 %v27, %v27
    %v60 = vmul.f32 %v28, %v28
    %v61 = vmul.f32 %v29, %v29
    %v62 = vmul.f32 %v30, %v30
    %v63 = vmul.f32 %v31, %v31
    %v64 = vmul.f32 %v32, %v32
    %v65 = vmul.f32 %v33, %v33
    %vm66 = vcmask 130048
    %v67 = vsel %vm66, %v50, 0.0
    %68 = vadd.xlane.f32.xlu0 %v67
    %v69 = vpop.xlane.xlu0 %68
    %v70 = vsel %vm66, %v51, 0.0
    %71 = vadd.xlane.f32.xlu0 %v70
    %v72 = vpop.xlane.xlu0 %71
    %v73 = vsel %vm66, %v52, 0.0
    %74 = vadd.xlane.f32.xlu0 %v73
    %v75 = vpop.xlane.xlu0 %74
    %v76 = vsel %vm66, %v53, 0.0
    %77 = vadd.xlane.f32.xlu0 %v76
    %v78 = vpop.xlane.xlu0 %77
    %v79 = vsel %vm66, %v54, 0.0
    %80 = vadd.xlane.f32.xlu0 %v79
    %v81 = vpop.xlane.xlu0 %80
    %v82 = vsel %vm66, %v55, 0.0
    %83 = vadd.xlane.f32.xlu0 %v82
    %v84 = vpop.xlane.xlu0 %83
    %v85 = vsel %vm66, %v56, 0.0
    %86 = vadd.xlane.f32.xlu0 %v85
    %v87 = vpop.xlane.xlu0 %86
    %v88 = vsel %vm66, %v57, 0.0
    %89 = vadd.xlane.f32.xlu0 %v88
    %v90 = vpop.xlane.xlu0 %89
    %v91 = vsel %vm66, %v58, 0.0
    %92 = vadd.xlane.f32.xlu0 %v91
    %v93 = vpop.xlane.xlu0 %92
    %v94 = vsel %vm66, %v59, 0.0
    %95 = vadd.xlane.f32.xlu0 %v94
    %v96 = vpop.xlane.xlu0 %95
    %v97 = vsel %vm66, %v60, 0.0
    %98 = vadd.xlane.f32.xlu0 %v97
    %v99 = vpop.xlane.xlu0 %98
    %v100 = vsel %vm66, %v61, 0.0
    %101 = vadd.xlane.f32.xlu0 %v100
    %v102 = vpop.xlane.xlu0 %101
    %v103 = vsel %vm66, %v62, 0.0
    %104 = vadd.xlane.f32.xlu0 %v103
    %v105 = vpop.xlane.xlu0 %104
    %v106 = vsel %vm66, %v63, 0.0
    %107 = vadd.xlane.f32.xlu0 %v106
    %v108 = vpop.xlane.xlu0 %107
    %v109 = vsel %vm66, %v64, 0.0
    %110 = vadd.xlane.f32.xlu0 %v109
    %v111 = vpop.xlane.xlu0 %110
    %v112 = vsel %vm66, %v65, 0.0
    %113 = vadd.xlane.f32.xlu0 %v112
    %v114 = vpop.xlane.xlu0 %113
    %v115 = vrsqrt.pop %v69
    %v116 = vmul.f32 %v69, %v115
    %vm117 = vcmp.eq.f32.partialorder %v69, inf
    %v118 = vsel %vm117, %v69, %v116
    %vm119 = vcmp.eq.f32.partialorder %v69, 0.0
    %v120 = vand.u32 %v69, 2147483648
    %v121 = vsel %vm119, %v120, %v118
    %v122 = vrsqrt.pop %v72
    %v123 = vmul.f32 %v72, %v122
    %vm124 = vcmp.eq.f32.partialorder %v72, inf
    %v125 = vsel %vm124, %v72, %v123
    %vm126 = vcmp.eq.f32.partialorder %v72, 0.0
    %v127 = vand.u32 %v72, 2147483648
    %v128 = vsel %vm126, %v127, %v125
    %v129 = vrsqrt.pop %v75
    %v130 = vmul.f32 %v75, %v129
    %vm131 = vcmp.eq.f32.partialorder %v75, inf
    %v132 = vsel %vm131, %v75, %v130
    %vm133 = vcmp.eq.f32.partialorder %v75, 0.0
    %v134 = vand.u32 %v75, 2147483648
    %v135 = vsel %vm133, %v134, %v132
    %v136 = vrsqrt.pop %v78
    %v137 = vmul.f32 %v78, %v136
    %vm138 = vcmp.eq.f32.partialorder %v78, inf
    %v139 = vsel %vm138, %v78, %v137
    %vm140 = vcmp.eq.f32.partialorder %v78, 0.0
    %v141 = vand.u32 %v78, 2147483648
    %v142 = vsel %vm140, %v141, %v139
    %v143 = vrsqrt.pop %v81
    %v144 = vmul.f32 %v81, %v143
    %vm145 = vcmp.eq.f32.partialorder %v81, inf
    %v146 = vsel %vm145, %v81, %v144
    %vm147 = vcmp.eq.f32.partialorder %v81, 0.0
    %v148 = vand.u32 %v81, 2147483648
    %v149 = vsel %vm147, %v148, %v146
    %v150 = vrsqrt.pop %v84
    %v151 = vmul.f32 %v84, %v150
    %vm152 = vcmp.eq.f32.partialorder %v84, inf
    %v153 = vsel %vm152, %v84, %v151
    %vm154 = vcmp.eq.f32.partialorder %v84, 0.0
    %v155 = vand.u32 %v84, 2147483648
    %v156 = vsel %vm154, %v155, %v153
    %v157 = vrsqrt.pop %v87
    %v158 = vmul.f32 %v87, %v157
    %vm159 = vcmp.eq.f32.partialorder %v87, inf
    %v160 = vsel %vm159, %v87, %v158
    %vm161 = vcmp.eq.f32.partialorder %v87, 0.0
    %v162 = vand.u32 %v87, 2147483648
    %v163 = vsel %vm161, %v162, %v160
    %v164 = vrsqrt.pop %v90
    %v165 = vmul.f32 %v90, %v164
    %vm166 = vcmp.eq.f32.partialorder %v90, inf
    %v167 = vsel %vm166, %v90, %v165
    %vm168 = vcmp.eq.f32.partialorder %v90, 0.0
    %v169 = vand.u32 %v90, 2147483648
    %v170 = vsel %vm168, %v169, %v167
    %v171 = vrsqrt.pop %v93
    %v172 = vmul.f32 %v93, %v171
    %vm173 = vcmp.eq.f32.partialorder %v93, inf
    %v174 = vsel %vm173, %v93, %v172
    %vm175 = vcmp.eq.f32.partialorder %v93, 0.0
    %v176 = vand.u32 %v93, 2147483648
    %v177 = vsel %vm175, %v176, %v174
    %v178 = vrsqrt.pop %v96
    %v179 = vmul.f32 %v96, %v178
    %vm180 = vcmp.eq.f32.partialorder %v96, inf
    %v181 = vsel %vm180, %v96, %v179
    %vm182 = vcmp.eq.f32.partialorder %v96, 0.0
    %v183 = vand.u32 %v96, 2147483648
    %v184 = vsel %vm182, %v183, %v181
    %v185 = vrsqrt.pop %v99
    %v186 = vmul.f32 %v99, %v185
    %vm187 = vcmp.eq.f32.partialorder %v99, inf
    %v188 = vsel %vm187, %v99, %v186
    %vm189 = vcmp.eq.f32.partialorder %v99, 0.0
    %v190 = vand.u32 %v99, 2147483648
    %v191 = vsel %vm189, %v190, %v188
    %v192 = vrsqrt.pop %v102
    %v193 = vmul.f32 %v102, %v192
    %vm194 = vcmp.eq.f32.partialorder %v102, inf
    %v195 = vsel %vm194, %v102, %v193
    %vm196 = vcmp.eq.f32.partialorder %v102, 0.0
    %v197 = vand.u32 %v102, 2147483648
    %v198 = vsel %vm196, %v197, %v195
    %v199 = vrsqrt.pop %v105
    %v200 = vmul.f32 %v105, %v199
    %vm201 = vcmp.eq.f32.partialorder %v105, inf
    %v202 = vsel %vm201, %v105, %v200
    %vm203 = vcmp.eq.f32.partialorder %v105, 0.0
    %v204 = vand.u32 %v105, 2147483648
    %v205 = vsel %vm203, %v204, %v202
    %v206 = vrsqrt.pop %v108
    %v207 = vmul.f32 %v108, %v206
    %vm208 = vcmp.eq.f32.partialorder %v108, inf
    %v209 = vsel %vm208, %v108, %v207
    %vm210 = vcmp.eq.f32.partialorder %v108, 0.0
    %v211 = vand.u32 %v108, 2147483648
    %v212 = vsel %vm210, %v211, %v209
    %v213 = vrsqrt.pop %v111
    %v214 = vmul.f32 %v111, %v213
    %vm215 = vcmp.eq.f32.partialorder %v111, inf
    %v216 = vsel %vm215, %v111, %v214
    %vm217 = vcmp.eq.f32.partialorder %v111, 0.0
    %v218 = vand.u32 %v111, 2147483648
    %v219 = vsel %vm217, %v218, %v216
    %v220 = vrsqrt.pop %v114
    %v221 = vmul.f32 %v114, %v220
    %vm222 = vcmp.eq.f32.partialorder %v114, inf
    %v223 = vsel %vm222, %v114, %v221
    %vm224 = vcmp.eq.f32.partialorder %v114, 0.0
    %v225 = vand.u32 %v114, 2147483648
    %v226 = vsel %vm224, %v225, %v223
    %v227 = vmul.f32 %v34, %v34
    %v228 = vmul.f32 %v35, %v35
    %v229 = vmul.f32 %v36, %v36
    %v230 = vmul.f32 %v37, %v37
    %v231 = vmul.f32 %v38, %v38
    %v232 = vmul.f32 %v39, %v39
    %v233 = vmul.f32 %v40, %v40
    %v234 = vmul.f32 %v41, %v41
    %v235 = vmul.f32 %v42, %v42
    %v236 = vmul.f32 %v43, %v43
    %v237 = vmul.f32 %v44, %v44
    %v238 = vmul.f32 %v45, %v45
    %v239 = vmul.f32 %v46, %v46
    %v240 = vmul.f32 %v47, %v47
    %v241 = vmul.f32 %v48, %v48
    %v242 = vmul.f32 %v49, %v49
    %v243 = vsel %vm66, %v227, 0.0
    %244 = vadd.xlane.f32.xlu0 %v243
    %v245 = vpop.xlane.xlu0 %244
    %v246 = vsel %vm66, %v228, 0.0
    %247 = vadd.xlane.f32.xlu0 %v246
    %v248 = vpop.xlane.xlu0 %247
    %v249 = vsel %vm66, %v229, 0.0
    %250 = vadd.xlane.f32.xlu0 %v249
    %v251 = vpop.xlane.xlu0 %250
    %v252 = vsel %vm66, %v230, 0.0
    %253 = vadd.xlane.f32.xlu0 %v252
    %v254 = vpop.xlane.xlu0 %253
    %v255 = vsel %vm66, %v231, 0.0
    %256 = vadd.xlane.f32.xlu0 %v255
    %v257 = vpop.xlane.xlu0 %256
    %v258 = vsel %vm66, %v232, 0.0
    %259 = vadd.xlane.f32.xlu0 %v258
    %v260 = vpop.xlane.xlu0 %259
    %v261 = vsel %vm66, %v233, 0.0
    %262 = vadd.xlane.f32.xlu0 %v261
    %v263 = vpop.xlane.xlu0 %262
    %v264 = vsel %vm66, %v234, 0.0
    %265 = vadd.xlane.f32.xlu0 %v264
    %v266 = vpop.xlane.xlu0 %265
    %v267 = vsel %vm66, %v235, 0.0
    %268 = vadd.xlane.f32.xlu0 %v267
    %v269 = vpop.xlane.xlu0 %268
    %v270 = vsel %vm66, %v236, 0.0
    %271 = vadd.xlane.f32.xlu0 %v270
    %v272 = vpop.xlane.xlu0 %271
    %v273 = vsel %vm66, %v237, 0.0
    %274 = vadd.xlane.f32.xlu0 %v273
    %v275 = vpop.xlane.xlu0 %274
    %v276 = vsel %vm66, %v238, 0.0
    %277 = vadd.xlane.f32.xlu0 %v276
    %v278 = vpop.xlane.xlu0 %277
    %v279 = vsel %vm66, %v239, 0.0
    %280 = vadd.xlane.f32.xlu0 %v279
    %v281 = vpop.xlane.xlu0 %280
    %v282 = vsel %vm66, %v240, 0.0
    %283 = vadd.xlane.f32.xlu0 %v282
    %v284 = vpop.xlane.xlu0 %283
    %v285 = vsel %vm66, %v241, 0.0
    %286 = vadd.xlane.f32.xlu0 %v285
    %v287 = vpop.xlane.xlu0 %286
    %v288 = vsel %vm66, %v242, 0.0
    %289 = vadd.xlane.f32.xlu0 %v288
    %v290 = vpop.xlane.xlu0 %289
    %v291 = vrsqrt.pop %v245
    %v292 = vmul.f32 %v245, %v291
    %vm293 = vcmp.eq.f32.partialorder %v245, inf
    %v294 = vsel %vm293, %v245, %v292
    %vm295 = vcmp.eq.f32.partialorder %v245, 0.0
    %v296 = vand.u32 %v245, 2147483648
    %v297 = vsel %vm295, %v296, %v294
    %v298 = vrsqrt.pop %v248
    %v299 = vmul.f32 %v248, %v298
    %vm300 = vcmp.eq.f32.partialorder %v248, inf
    %v301 = vsel %vm300, %v248, %v299
    %vm302 = vcmp.eq.f32.partialorder %v248, 0.0
    %v303 = vand.u32 %v248, 2147483648
    %v304 = vsel %vm302, %v303, %v301
    %v305 = vrsqrt.pop %v251
    %v306 = vmul.f32 %v251, %v305
    %vm307 = vcmp.eq.f32.partialorder %v251, inf
    %v308 = vsel %vm307, %v251, %v306
    %vm309 = vcmp.eq.f32.partialorder %v251, 0.0
    %v310 = vand.u32 %v251, 2147483648
    %v311 = vsel %vm309, %v310, %v308
    %v312 = vrsqrt.pop %v254
    %v313 = vmul.f32 %v254, %v312
    %vm314 = vcmp.eq.f32.partialorder %v254, inf
    %v315 = vsel %vm314, %v254, %v313
    %vm316 = vcmp.eq.f32.partialorder %v254, 0.0
    %v317 = vand.u32 %v254, 2147483648
    %v318 = vsel %vm316, %v317, %v315
    %v319 = vrsqrt.pop %v257
    %v320 = vmul.f32 %v257, %v319
    %vm321 = vcmp.eq.f32.partialorder %v257, inf
    %v322 = vsel %vm321, %v257, %v320
    %vm323 = vcmp.eq.f32.partialorder %v257, 0.0
    %v324 = vand.u32 %v257, 2147483648
    %v325 = vsel %vm323, %v324, %v322
    %v326 = vrsqrt.pop %v260
    %v327 = vmul.f32 %v260, %v326
    %vm328 = vcmp.eq.f32.partialorder %v260, inf
    %v329 = vsel %vm328, %v260, %v327
    %vm330 = vcmp.eq.f32.partialorder %v260, 0.0
    %v331 = vand.u32 %v260, 2147483648
    %v332 = vsel %vm330, %v331, %v329
    %v333 = vrsqrt.pop %v263
    %v334 = vmul.f32 %v263, %v333
    %vm335 = vcmp.eq.f32.partialorder %v263, inf
    %v336 = vsel %vm335, %v263, %v334
    %vm337 = vcmp.eq.f32.partialorder %v263, 0.0
    %v338 = vand.u32 %v263, 2147483648
    %v339 = vsel %vm337, %v338, %v336
    %v340 = vrsqrt.pop %v266
    %v341 = vmul.f32 %v266, %v340
    %vm342 = vcmp.eq.f32.partialorder %v266, inf
    %v343 = vsel %vm342, %v266, %v341
    %vm344 = vcmp.eq.f32.partialorder %v266, 0.0
    %v345 = vand.u32 %v266, 2147483648
    %v346 = vsel %vm344, %v345, %v343
    %v347 = vrsqrt.pop %v269
    %v348 = vmul.f32 %v269, %v347
    %vm349 = vcmp.eq.f32.partialorder %v269, inf
    %v350 = vsel %vm349, %v269, %v348
    %vm351 = vcmp.eq.f32.partialorder %v269, 0.0
    %v352 = vand.u32 %v269, 2147483648
    %v353 = vsel %vm351, %v352, %v350
    %v354 = vrsqrt.pop %v272
    %v355 = vmul.f32 %v272, %v354
    %vm356 = vcmp.eq.f32.partialorder %v272, inf
    %v357 = vsel %vm356, %v272, %v355
    %vm358 = vcmp.eq.f32.partialorder %v272, 0.0
    %v359 = vand.u32 %v272, 2147483648
    %v360 = vsel %vm358, %v359, %v357
    %v361 = vrsqrt.pop %v275
    %v362 = vmul.f32 %v275, %v361
    %vm363 = vcmp.eq.f32.partialorder %v275, inf
    %v364 = vsel %vm363, %v275, %v362
    %vm365 = vcmp.eq.f32.partialorder %v275, 0.0
    %v366 = vand.u32 %v275, 2147483648
    %v367 = vsel %vm365, %v366, %v364
    %v368 = vrsqrt.pop %v278
    %v369 = vmul.f32 %v278, %v368
    %vm370 = vcmp.eq.f32.partialorder %v278, inf
    %v371 = vsel %vm370, %v278, %v369
    %vm372 = vcmp.eq.f32.partialorder %v278, 0.0
    %v373 = vand.u32 %v278, 2147483648
    %v374 = vsel %vm372, %v373, %v371
    %v375 = vrsqrt.pop %v281
    %v376 = vmul.f32 %v281, %v375
    %vm377 = vcmp.eq.f32.partialorder %v281, inf
    %v378 = vsel %vm377, %v281, %v376
    %vm379 = vcmp.eq.f32.partialorder %v281, 0.0
    %v380 = vand.u32 %v281, 2147483648
    %v381 = vsel %vm379, %v380, %v378
    %v382 = vrsqrt.pop %v284
    %v383 = vmul.f32 %v284, %v382
    %vm384 = vcmp.eq.f32.partialorder %v284, inf
    %v385 = vsel %vm384, %v284, %v383
    %vm386 = vcmp.eq.f32.partialorder %v284, 0.0
    %v387 = vand.u32 %v284, 2147483648
    %v388 = vsel %vm386, %v387, %v385
    %v389 = vrsqrt.pop %v287
    %v390 = vmul.f32 %v287, %v389
    %vm391 = vcmp.eq.f32.partialorder %v287, inf
    %v392 = vsel %vm391, %v287, %v390
    %vm393 = vcmp.eq.f32.partialorder %v287, 0.0
    %v394 = vand.u32 %v287, 2147483648
    %v395 = vsel %vm393, %v394, %v392
    %v396 = vrsqrt.pop %v290
    %v397 = vmul.f32 %v290, %v396
    %vm398 = vcmp.eq.f32.partialorder %v290, inf
    %v399 = vsel %vm398, %v290, %v397
    %vm400 = vcmp.eq.f32.partialorder %v290, 0.0
    %v401 = vand.u32 %v290, 2147483648
    %v402 = vsel %vm400, %v401, %v399
    %v403 = vadd.f32 %v121, 1e-10
    %v404 = vadd.f32 %v128, 1e-10
    %v405 = vadd.f32 %v135, 1e-10
    %v406 = vadd.f32 %v142, 1e-10
    %v407 = vadd.f32 %v149, 1e-10
    %v408 = vadd.f32 %v156, 1e-10
    %v409 = vadd.f32 %v163, 1e-10
    %v410 = vadd.f32 %v170, 1e-10
    %v411 = vadd.f32 %v177, 1e-10
    %v412 = vadd.f32 %v184, 1e-10
    %v413 = vadd.f32 %v191, 1e-10
    %v414 = vadd.f32 %v198, 1e-10
    %v415 = vadd.f32 %v205, 1e-10
    %v416 = vadd.f32 %v212, 1e-10
    %v417 = vadd.f32 %v219, 1e-10
    %v418 = vadd.f32 %v226, 1e-10
    %v419 = vrcp.pop %v403
    %v420 = vmul.f32 %v18, %v419
    %v421 = vrcp.pop %v404
    %v422 = vmul.f32 %v19, %v421
    %v423 = vrcp.pop %v405
    %v424 = vmul.f32 %v20, %v423
    %v425 = vrcp.pop %v406
    %v426 = vmul.f32 %v21, %v425
    %v427 = vrcp.pop %v407
    %v428 = vmul.f32 %v22, %v427
    %v429 = vrcp.pop %v408
    %v430 = vmul.f32 %v23, %v429
    %v431 = vrcp.pop %v409
    %v432 = vmul.f32 %v24, %v431
    %v433 = vrcp.pop %v410
    %v434 = vmul.f32 %v25, %v433
    %v435 = vrcp.pop %v411
    %v436 = vmul.f32 %v26, %v435
    %v437 = vrcp.pop %v412
    %v438 = vmul.f32 %v27, %v437
    %v439 = vrcp.pop %v413
    %v440 = vmul.f32 %v28, %v439
    %v441 = vrcp.pop %v414
    %v442 = vmul.f32 %v29, %v441
    %v443 = vrcp.pop %v415
    %v444 = vmul.f32 %v30, %v443
    %v445 = vrcp.pop %v416
    %v446 = vmul.f32 %v31, %v445
    %v447 = vrcp.pop %v417
    %v448 = vmul.f32 %v32, %v447
    %v449 = vrcp.pop %v418
    %v450 = vmul.f32 %v33, %v449
    %v451 = vadd.f32 %v297, 1e-10
    %v452 = vadd.f32 %v304, 1e-10
    %v453 = vadd.f32 %v311, 1e-10
    %v454 = vadd.f32 %v318, 1e-10
    %v455 = vadd.f32 %v325, 1e-10
    %v456 = vadd.f32 %v332, 1e-10
    %v457 = vadd.f32 %v339, 1e-10
    %v458 = vadd.f32 %v346, 1e-10
    %v459 = vadd.f32 %v353, 1e-10
    %v460 = vadd.f32 %v360, 1e-10
    %v461 = vadd.f32 %v367, 1e-10
    %v462 = vadd.f32 %v374, 1e-10
    %v463 = vadd.f32 %v381, 1e-10
    %v464 = vadd.f32 %v388, 1e-10
    %v465 = vadd.f32 %v395, 1e-10
    %v466 = vadd.f32 %v402, 1e-10
    %v467 = vrcp.pop %v451
    %v468 = vmul.f32 %v34, %v467
    %v469 = vrcp.pop %v452
    %v470 = vmul.f32 %v35, %v469
    %v471 = vrcp.pop %v453
    %v472 = vmul.f32 %v36, %v471
    %v473 = vrcp.pop %v454
    %v474 = vmul.f32 %v37, %v473
    %v475 = vrcp.pop %v455
    %v476 = vmul.f32 %v38, %v475
    %v477 = vrcp.pop %v456
    %v478 = vmul.f32 %v39, %v477
    %v479 = vrcp.pop %v457
    %v480 = vmul.f32 %v40, %v479
    %v481 = vrcp.pop %v458
    %v482 = vmul.f32 %v41, %v481
    %v483 = vrcp.pop %v459
    %v484 = vmul.f32 %v42, %v483
    %v485 = vrcp.pop %v460
    %v486 = vmul.f32 %v43, %v485
    %v487 = vrcp.pop %v461
    %v488 = vmul.f32 %v44, %v487
    %v489 = vrcp.pop %v462
    %v490 = vmul.f32 %v45, %v489
    %v491 = vrcp.pop %v463
    %v492 = vmul.f32 %v46, %v491
    %v493 = vrcp.pop %v464
    %v494 = vmul.f32 %v47, %v493
    %v495 = vrcp.pop %v465
    %v496 = vmul.f32 %v48, %v495
    %v497 = vrcp.pop %v466
    %v498 = vmul.f32 %v49, %v497
    %s499 = sld [smem:[#allocation2]]
    %v500 = vsub.f32 %v420, %v468
    %v501 = vsub.f32 %v422, %v470
    %v502 = vsub.f32 %v424, %v472
    %v503 = vsub.f32 %v426, %v474
    %v504 = vsub.f32 %v428, %v476
    %v505 = vsub.f32 %v430, %v478
    %v506 = vsub.f32 %v432, %v480
    %v507 = vsub.f32 %v434, %v482
    %v508 = vsub.f32 %v436, %v484
    %v509 = vsub.f32 %v438, %v486
    %v510 = vsub.f32 %v440, %v488
    %v511 = vsub.f32 %v442, %v490
    %v512 = vsub.f32 %v444, %v492
    %v513 = vsub.f32 %v446, %v494
    %v514 = vsub.f32 %v448, %v496
    %v515 = vsub.f32 %v450, %v498
    %v516 = vand.u32 2147483647, %v500
    %v517 = vand.u32 2147483647, %v501
    %v518 = vand.u32 2147483647, %v502
    %v519 = vand.u32 2147483647, %v503
    %v520 = vand.u32 2147483647, %v504
    %v521 = vand.u32 2147483647, %v505
    %v522 = vand.u32 2147483647, %v506
    %v523 = vand.u32 2147483647, %v507
    %v524 = vand.u32 2147483647, %v508
    %v525 = vand.u32 2147483647, %v509
    %v526 = vand.u32 2147483647, %v510
    %v527 = vand.u32 2147483647, %v511
    %v528 = vand.u32 2147483647, %v512
    %v529 = vand.u32 2147483647, %v513
    %v530 = vand.u32 2147483647, %v514
    %v531 = vand.u32 2147483647, %v515
    %v532 = vsel %vm66, %v516, 0.0
    %v533 = vsel %vm66, %v517, 0.0
    %v534 = vadd.f32 %v532, %v533
    %v535 = vsel %vm66, %v518, 0.0
    %v536 = vadd.f32 %v534, %v535
    %v537 = vsel %vm66, %v519, 0.0
    %v538 = vadd.f32 %v536, %v537
    %v539 = vsel %vm66, %v520, 0.0
    %v540 = vadd.f32 %v538, %v539
    %v541 = vsel %vm66, %v521, 0.0
    %v542 = vadd.f32 %v540, %v541
    %v543 = vsel %vm66, %v522, 0.0
    %v544 = vadd.f32 %v542, %v543
    %v545 = vsel %vm66, %v523, 0.0
    %v546 = vadd.f32 %v544, %v545
    %v547 = vsel %vm66, %v524, 0.0
    %v548 = vadd.f32 %v546, %v547
    %v549 = vsel %vm66, %v525, 0.0
    %v550 = vadd.f32 %v548, %v549
    %v551 = vsel %vm66, %v526, 0.0
    %v552 = vadd.f32 %v550, %v551
    %v553 = vsel %vm66, %v527, 0.0
    %v554 = vadd.f32 %v552, %v553
    %v555 = vsel %vm66, %v528, 0.0
    %v556 = vadd.f32 %v554, %v555
    %v557 = vsel %vm66, %v529, 0.0
    %v558 = vadd.f32 %v556, %v557
    %v559 = vsel %vm66, %v530, 0.0
    %v560 = vadd.f32 %v558, %v559
    %v561 = vsel %vm66, %v531, 0.0
    %v562 = vadd.f32 %v560, %v561
    %563 = vadd.xlane.f32.xlu0 %v562
    %v564 = vpop.xlane.xlu0 %563
    %v565 = vrot.slane %v564, 4
    %v566 = vadd.f32 %v564, %v565
    %v567 = vrot.slane %v566, 2
    %v568 = vadd.f32 %v566, %v567
    %v569 = vrot.slane %v568, 1
    %v570 = vadd.f32 %v568, %v569
    %s571 = vtos %v570
    %s572 = sadd.f32 %s499, %s571
    %s573 = scalar_lea.smem [#allocation2], 0
    %574 = sst [smem:[%s573]] %s572
    // Predicated region
    $region14: #{_lambda_.7} parent=1 // pred_check
      %p575 = pneg %p12
    $region15: #{_lambda_.7} parent=1 // pred_check_branch
      %577 = sbr.rel (%p575) target = $region17
    $region16: #{_lambda_.7} parent=1 // pred_region
      %s578 = sld [smem:[#allocation2]]
      %s579 = smul.f32 %s578, 0.00048828125
      %s580 = scalar_lea.smem [#allocation3], 0
      %581 = sst [smem:[%s580]] %s579
    $region17: #{_lambda_.7} parent=1 // pred_fallthru
      _
    // Predicated region
    $region18: #{_lambda_.7} parent=1 // pred_check
      _
    $region19: #{_lambda_.7} parent=1 // pred_check_branch
      %583 = sbr.rel (0) target = $region21
    $region20: #{_lambda_.7} parent=1 // pred_region
      %s585 = ssub.s32 16, 16
      %586 = vsyncadd [#allocation4], %s585
      %589 = dma.smem_to_hbm [#allocation3], 16, %s2, [#allocation4]
    $region21: #{_lambda_.7} parent=1 // pred_fallthru
      _
    // Predicated region
    $region22: #{_lambda_.7} parent=1 // pred_check
      _
    $region23: #{_lambda_.7} parent=1 // pred_check_branch
      %591 = sbr.rel (0) target = $region25
    $region24: #{_lambda_.7} parent=1 // pred_region
      %592 = dma.done [#allocation4], 16
    $region25: #{_lambda_.7} parent=1 // pred_fallthru
      _
    %593 = sfence
    %594 = vsyncpa [#allocation4], 1

// kernel: _lambda_.6
$region0: #{_lambda_.6}
  #allocation0 [shape = 'u32[]', space=smem, size = 0x4, offset = 0x4, fixed_abs, tag = 'smem constant byte address 0x4 - core index']
  #allocation1 [shape = 'u32[144,128]{1,0:T(1,128)}', space=vmem, size = 0x12000, scoped, tag = 'internal scratch']
  %s0 = inlined_call_operand.vmem [shape: bf16[256,27], index: 0, kind: input, shape index: {}]
  %s1 = inlined_call_operand.vmem [shape: bf16[27,128], index: 1, kind: input, shape index: {}]
  %s2 = inlined_call_operand.vmem [shape: f32[1,128], index: 2, kind: input, shape index: {}]
  %s3 = inlined_call_operand.vmem [shape: f32[256,128], index: 3, kind: output, shape index: {}]
  %s4 = sld [smem:[#allocation0]]
  $region22: #{_lambda_.6} parent=0
    _
  %s6 = ssub.s32 1, %s4
  %s7 = scalar_select 0, %s6, %s4
  // Predicated region
  $region2: #{_lambda_.6} parent=0 // pred_check
    _
  $region3: #{_lambda_.6} parent=0 // pred_check_branch
    %9 = sbr.rel (0) target = $region5
  $region4: #{_lambda_.6} parent=0 // pred_region
    _
  $region5: #{_lambda_.6} parent=0 // pred_fallthru
    _
  // Predicated region
  $region6: #{_lambda_.6} parent=0 // pred_check
    _
  $region7: #{_lambda_.6} parent=0 // pred_check_branch
    %11 = sbr.rel (0) target = $region9
  $region8: #{_lambda_.6} parent=0 // pred_region
    _
  $region9: #{_lambda_.6} parent=0 // pred_fallthru
    _
  // Predicated region
  $region10: #{_lambda_.6} parent=0 // pred_check
    _
  $region11: #{_lambda_.6} parent=0 // pred_check_branch
    %13 = sbr.rel (0) target = $region13
  $region12: #{_lambda_.6} parent=0 // pred_region
    _
  $region13: #{_lambda_.6} parent=0 // pred_fallthru
    _
  %v15 = vld [vmem:[%s0] sm:$0xf]
  %v16 = vld [vmem:[%s0 + $0x4] sm:$0xf]
  %v17 = vld [vmem:[%s0 + $0x8] sm:$0xf]
  %v18 = vld [vmem:[%s0 + $0xc] sm:$0xf]
  %v19 = vld [vmem:[%s0 + $0x10] sm:$0xf]
  %v20 = vld [vmem:[%s0 + $0x14] sm:$0xf]
  %v21 = vld [vmem:[%s0 + $0x18] sm:$0xf]
  %v22 = vld [vmem:[%s0 + $0x1c] sm:$0xf]
  %v23 = vld [vmem:[%s0 + $0x20] sm:$0xf]
  %v24 = vld [vmem:[%s0 + $0x24] sm:$0xf]
  %v25 = vld [vmem:[%s0 + $0x28] sm:$0xf]
  %v26 = vld [vmem:[%s0 + $0x2c] sm:$0xf]
  %v27 = vld [vmem:[%s0 + $0x30] sm:$0xf]
  %v28 = vld [vmem:[%s0 + $0x34] sm:$0xf]
  %v29 = vld [vmem:[%s0 + $0x38] sm:$0xf]
  %v30 = vld [vmem:[%s0 + $0x3c] sm:$0xf]
  %v31 = vld [vmem:[%s0 + $0x40] sm:$0xf]
  %v32 = vld [vmem:[%s0 + $0x44] sm:$0xf]
  %v33 = vld [vmem:[%s0 + $0x48] sm:$0xf]
  %v34 = vld [vmem:[%s0 + $0x4c] sm:$0xf]
  %v35 = vld [vmem:[%s0 + $0x50] sm:$0xf]
  %v36 = vld [vmem:[%s0 + $0x54] sm:$0xf]
  %v37 = vld [vmem:[%s0 + $0x58] sm:$0xf]
  %v38 = vld [vmem:[%s0 + $0x5c] sm:$0xf]
  %v39 = vld [vmem:[%s0 + $0x60] sm:$0xf]
  %v40 = vld [vmem:[%s0 + $0x64] sm:$0xf]
  %v41 = vld [vmem:[%s0 + $0x68] sm:$0xf]
  %v42 = vld [vmem:[%s0 + $0x6c] sm:$0xf]
  %v43 = vld [vmem:[%s0 + $0x70] sm:$0xf]
  %v44 = vld [vmem:[%s0 + $0x74] sm:$0xf]
  %v45 = vld [vmem:[%s0 + $0x78] sm:$0xf]
  %v46 = vld [vmem:[%s0 + $0x7c] sm:$0xf]
  %v47 = vld [vmem:[%s1] sm:$0xf]
  %v48 = vld [vmem:[%s1 + $0x4] sm:$0xf]
  %v49 = vld [vmem:[%s1 + $0x8] sm:$0xf]
  %v50 = vld [vmem:[%s1 + $0xc] sm:$0x3]
  %v51 = vld [vmem:[%s2] sm:$0x1]
  %v53 = vlaneseq
  %v54 = vshrl.u32 %v53, 7
  %v55 = vsub.s32 0, %v54
  %v56 = vrot.slane %v51, %v55
  %v90 = vunpack.c.l.b16 %v15
  %v91 = vunpack.c.l.b16 %v16
  %v92 = vunpack.c.l.b16 %v17
  %v93 = vunpack.c.l.b16 %v18
  %v94 = vunpack.c.l.b16 %v19
  %v95 = vunpack.c.l.b16 %v20
  %v96 = vunpack.c.l.b16 %v21
  %v97 = vunpack.c.l.b16 %v22
  %v98 = vunpack.c.l.b16 %v23
  %v99 = vunpack.c.l.b16 %v24
  %v100 = vunpack.c.l.b16 %v25
  %v101 = vunpack.c.l.b16 %v26
  %v102 = vunpack.c.l.b16 %v27
  %v103 = vunpack.c.l.b16 %v28
  %v104 = vunpack.c.l.b16 %v29
  %v105 = vunpack.c.l.b16 %v30
  %v106 = vunpack.c.l.b16 %v31
  %v107 = vunpack.c.l.b16 %v32
  %v108 = vunpack.c.l.b16 %v33
  %v109 = vunpack.c.l.b16 %v34
  %v110 = vunpack.c.l.b16 %v35
  %v111 = vunpack.c.l.b16 %v36
  %v112 = vunpack.c.l.b16 %v37
  %v113 = vunpack.c.l.b16 %v38
  %v114 = vunpack.c.l.b16 %v39
  %v115 = vunpack.c.l.b16 %v40
  %v116 = vunpack.c.l.b16 %v41
  %v117 = vunpack.c.l.b16 %v42
  %v118 = vunpack.c.l.b16 %v43
  %v119 = vunpack.c.l.b16 %v44
  %v120 = vunpack.c.l.b16 %v45
  %v121 = vunpack.c.l.b16 %v46
  %v122 = vpack.c.b16 %v91, %v90
  %v123 = vpack.c.b16 %v93, %v92
  %v124 = vpack.c.b16 %v95, %v94
  %v125 = vpack.c.b16 %v97, %v96
  %v126 = vpack.c.b16 %v99, %v98
  %v127 = vpack.c.b16 %v101, %v100
  %v128 = vpack.c.b16 %v103, %v102
  %v129 = vpack.c.b16 %v105, %v104
  %v130 = vpack.c.b16 %v107, %v106
  %v131 = vpack.c.b16 %v109, %v108
  %v132 = vpack.c.b16 %v111, %v110
  %v133 = vpack.c.b16 %v113, %v112
  %v134 = vpack.c.b16 %v115, %v114
  %v135 = vpack.c.b16 %v117, %v116
  %v136 = vpack.c.b16 %v119, %v118
  %v137 = vpack.c.b16 %v121, %v120
  %v142 = vunpack.c.l.b16 %v47
  %v143 = vunpack.c.l.b16 %v48
  %v144 = vunpack.c.l.b16 %v49
  %v145 = vunpack.c.l.b16 %v50
  %v146 = vpack.c.b16 %v143, %v142
  %v147 = vpack.c.b16 %v145, %v144
  %vm149 = vcmask 220160
  %v151 = vsel %vm149, %v122, 0
  %v154 = vsel %vm149, %v123, 0
  %v157 = vsel %vm149, %v124, 0
  %v160 = vsel %vm149, %v125, 0
  %v163 = vsel %vm149, %v126, 0
  %v166 = vsel %vm149, %v127, 0
  %v169 = vsel %vm149, %v128, 0
  %v172 = vsel %vm149, %v129, 0
  %v175 = vsel %vm149, %v130, 0
  %v178 = vsel %vm149, %v131, 0
  %v181 = vsel %vm149, %v132, 0
  %v184 = vsel %vm149, %v133, 0
  %v187 = vsel %vm149, %v134, 0
  %v190 = vsel %vm149, %v135, 0
  %v193 = vsel %vm149, %v136, 0
  %v196 = vsel %vm149, %v137, 0
  %vm198 = vcmask 1044480
  %vm199 = vcmask 1045504
  %v200 = vsel %vm198, 4294967295, 65535
  %v201 = vsel %vm199, %v200, 0
  %v203 = vand.u32 %v147, %v201
  %205 = vmatprep.subr.bf16.mxu0 0
  %206 = vmatpush1.bf16.msra.mxu0 %v146
  %207 = vmatprep.subr.bf16.mxu0 0
  %208 = vmatpush1.bf16.msra.mxu0 %v203
  %209 = vmatprep.subr.bf16.mxu0 0
  %210 = vmatpush1.bf16.msra.mxu0 0
  %211 = vmatprep.subr.bf16.mxu0 0
  %212 = vmatpush1.bf16.msra.mxu0 0
  %213 = vmatprep.subr.bf16.mxu0 0
  %214 = vmatpush1.bf16.msra.mxu0 0
  %215 = vmatprep.subr.bf16.mxu0 0
  %216 = vmatpush1.bf16.msra.mxu0 0
  %217 = vmatprep.subr.bf16.mxu0 0
  %218 = vmatpush1.bf16.msra.mxu0 0
  %219 = vmatprep.subr.bf16.mxu0 0
  %220 = vmatpush1.bf16.msra.mxu0 0
  %221 = vmatprep.subr.bf16.mxu0 0
  %222 = vmatpush1.bf16.msra.mxu0 0
  %223 = vmatprep.subr.bf16.mxu0 0
  %224 = vmatpush1.bf16.msra.mxu0 0
  %225 = vmatprep.subr.bf16.mxu0 0
  %226 = vmatpush1.bf16.msra.mxu0 0
  %227 = vmatprep.subr.bf16.mxu0 0
  %228 = vmatpush1.bf16.msra.mxu0 0
  %229 = vmatprep.subr.bf16.mxu0 0
  %230 = vmatpush1.bf16.msra.mxu0 0
  %231 = vmatprep.subr.bf16.mxu0 0
  %232 = vmatpush1.bf16.msra.mxu0 0
  %233 = vmatprep.subr.bf16.mxu0 0
  %234 = vmatpush1.bf16.msra.mxu0 0
  %235 = vmatprep.subr.bf16.mxu0 0
  %236 = vmatpush1.bf16.msra.mxu0 0
  %237 = vmatprep.mubr.bf16.mxu0 0
  %238 = vmatmul.mubr.bf16.gmra.mrb[0].mxu0 %v151
  %v239 = vpop.f32.mrb[0].mxu0
  %v240 = vadd.f32 %v56, %v239
  %v241 = vpop.f32.mrb[0].mxu0
  %v242 = vpop.f32.mrb[0].mxu0
  %v243 = vadd.f32 %v56, %v242
  %v244 = vpop.f32.mrb[0].mxu0
  %245 = vmatprep.mubr.bf16.mxu0 0
  %246 = vmatmul.mubr.bf16.gmra.mrb[0].mxu0 %v154
  %v247 = vpop.f32.mrb[0].mxu0
  %v248 = vadd.f32 %v56, %v247
  %v249 = vpop.f32.mrb[0].mxu0
  %v250 = vpop.f32.mrb[0].mxu0
  %v251 = vadd.f32 %v56, %v250
  %v252 = vpop.f32.mrb[0].mxu0
  %253 = vmatprep.mubr.bf16.mxu0 0
  %254 = vmatmul.mubr.bf16.gmra.mrb[0].mxu0 %v157
  %v255 = vpop.f32.mrb[0].mxu0
  %v256 = vadd.f32 %v56, %v255
  %v257 = vpop.f32.mrb[0].mxu0
  %v258 = vpop.f32.mrb[0].mxu0
  %v259 = vadd.f32 %v56, %v258
  %v260 = vpop.f32.mrb[0].mxu0
  %261 = vmatprep.mubr.bf16.mxu0 0
  %262 = vmatmul.mubr.bf16.gmra.mrb[0].mxu0 %v160
  %v263 = vpop.f32.mrb[0].mxu0
  %v264 = vadd.f32 %v56, %v263
  %v265 = vpop.f32.mrb[0].mxu0
  %v266 = vpop.f32.mrb[0].mxu0
  %v267 = vadd.f32 %v56, %v266
  %v268 = vpop.f32.mrb[0].mxu0
  %269 = vmatprep.mubr.bf16.mxu0 0
  %270 = vmatmul.mubr.bf16.gmra.mrb[0].mxu0 %v163
  %v271 = vpop.f32.mrb[0].mxu0
  %v272 = vadd.f32 %v56, %v271
  %v273 = vpop.f32.mrb[0].mxu0
  %v274 = vpop.f32.mrb[0].mxu0
  %v275 = vadd.f32 %v56, %v274
  %v276 = vpop.f32.mrb[0].mxu0
  %277 = vmatprep.mubr.bf16.mxu0 0
  %278 = vmatmul.mubr.bf16.gmra.mrb[0].mxu0 %v166
  %v279 = vpop.f32.mrb[0].mxu0
  %v280 = vadd.f32 %v56, %v279
  %v281 = vpop.f32.mrb[0].mxu0
  %v282 = vpop.f32.mrb[0].mxu0
  %v283 = vadd.f32 %v56, %v282
  %v284 = vpop.f32.mrb[0].mxu0
  %285 = vmatprep.mubr.bf16.mxu0 0
  %286 = vmatmul.mubr.bf16.gmra.mrb[0].mxu0 %v169
  %v287 = vpop.f32.mrb[0].mxu0
  %v288 = vadd.f32 %v56, %v287
  %v289 = vpop.f32.mrb[0].mxu0
  %v290 = vpop.f32.mrb[0].mxu0
  %v291 = vadd.f32 %v56, %v290
  %v292 = vpop.f32.mrb[0].mxu0
  %293 = vmatprep.mubr.bf16.mxu0 0
  %294 = vmatmul.mubr.bf16.gmra.mrb[0].mxu0 %v172
  %v295 = vpop.f32.mrb[0].mxu0
  %v296 = vadd.f32 %v56, %v295
  %v297 = vpop.f32.mrb[0].mxu0
  %v298 = vpop.f32.mrb[0].mxu0
  %v299 = vadd.f32 %v56, %v298
  %v300 = vpop.f32.mrb[0].mxu0
  %301 = vmatprep.mubr.bf16.mxu0 0
  %302 = vmatmul.mubr.bf16.gmra.mrb[0].mxu0 %v175
  %v303 = vpop.f32.mrb[0].mxu0
  %v304 = vadd.f32 %v56, %v303
  %v305 = vpop.f32.mrb[0].mxu0
  %v306 = vpop.f32.mrb[0].mxu0
  %v307 = vadd.f32 %v56, %v306
  %v308 = vpop.f32.mrb[0].mxu0
  %309 = vmatprep.mubr.bf16.mxu0 0
  %310 = vmatmul.mubr.bf16.gmra.mrb[0].mxu0 %v178
  %v311 = vpop.f32.mrb[0].mxu0
  %v312 = vadd.f32 %v56, %v311
  %v313 = vpop.f32.mrb[0].mxu0
  %v314 = vpop.f32.mrb[0].mxu0
  %v315 = vadd.f32 %v56, %v314
  %v316 = vpop.f32.mrb[0].mxu0
  %317 = vmatprep.mubr.bf16.mxu0 0
  %318 = vmatmul.mubr.bf16.gmra.mrb[0].mxu0 %v181
  %v319 = vpop.f32.mrb[0].mxu0
  %v320 = vadd.f32 %v56, %v319
  %v321 = vpop.f32.mrb[0].mxu0
  %v322 = vpop.f32.mrb[0].mxu0
  %v323 = vadd.f32 %v56, %v322
  %v324 = vpop.f32.mrb[0].mxu0
  %325 = vmatprep.mubr.bf16.mxu0 0
  %326 = vmatmul.mubr.bf16.gmra.mrb[0].mxu0 %v184
  %v327 = vpop.f32.mrb[0].mxu0
  %v328 = vadd.f32 %v56, %v327
  %v329 = vpop.f32.mrb[0].mxu0
  %v330 = vpop.f32.mrb[0].mxu0
  %v331 = vadd.f32 %v56, %v330
  %v332 = vpop.f32.mrb[0].mxu0
  %333 = vmatprep.mubr.bf16.mxu0 0
  %334 = vmatmul.mubr.bf16.gmra.mrb[0].mxu0 %v187
  %v335 = vpop.f32.mrb[0].mxu0
  %v336 = vadd.f32 %v56, %v335
  %v337 = vpop.f32.mrb[0].mxu0
  %v338 = vpop.f32.mrb[0].mxu0
  %v339 = vadd.f32 %v56, %v338
  %v340 = vpop.f32.mrb[0].mxu0
  %341 = vmatprep.mubr.bf16.mxu0 0
  %342 = vmatmul.mubr.bf16.gmra.mrb[0].mxu0 %v190
  %v343 = vpop.f32.mrb[0].mxu0
  %v344 = vadd.f32 %v56, %v343
  %v345 = vpop.f32.mrb[0].mxu0
  %v346 = vpop.f32.mrb[0].mxu0
  %v347 = vadd.f32 %v56, %v346
  %v348 = vpop.f32.mrb[0].mxu0
  %349 = vmatprep.mubr.bf16.mxu0 0
  %350 = vmatmul.mubr.bf16.gmra.mrb[0].mxu0 %v193
  %v351 = vpop.f32.mrb[0].mxu0
  %v352 = vadd.f32 %v56, %v351
  %v353 = vpop.f32.mrb[0].mxu0
  %v354 = vpop.f32.mrb[0].mxu0
  %v355 = vadd.f32 %v56, %v354
  %v356 = vpop.f32.mrb[0].mxu0
  %357 = vmatprep.mubr.bf16.mxu0 0
  %358 = vmatmul.mubr.bf16.gmra.mrb[0].mxu0 %v196
  %v359 = vpop.f32.mrb[0].mxu0
  %v360 = vadd.f32 %v56, %v359
  %v361 = vpop.f32.mrb[0].mxu0
  %v362 = vpop.f32.mrb[0].mxu0
  %v363 = vadd.f32 %v56, %v362
  %v364 = vpop.f32.mrb[0].mxu0
  %365 = vdwg.mxu0
  %v366 = vmax.f32 %v240, 0.0
  %v367 = vmax.f32 %v243, 0.0
  %v368 = vmax.f32 %v248, 0.0
  %v369 = vmax.f32 %v251, 0.0
  %v370 = vmax.f32 %v256, 0.0
  %v371 = vmax.f32 %v259, 0.0
  %v372 = vmax.f32 %v264, 0.0
  %v373 = vmax.f32 %v267, 0.0
  %v374 = vmax.f32 %v272, 0.0
  %v375 = vmax.f32 %v275, 0.0
  %v376 = vmax.f32 %v280, 0.0
  %v377 = vmax.f32 %v283, 0.0
  %v378 = vmax.f32 %v288, 0.0
  %v379 = vmax.f32 %v291, 0.0
  %v380 = vmax.f32 %v296, 0.0
  %v381 = vmax.f32 %v299, 0.0
  %v382 = vmax.f32 %v304, 0.0
  %v383 = vmax.f32 %v307, 0.0
  %v384 = vmax.f32 %v312, 0.0
  %v385 = vmax.f32 %v315, 0.0
  %v386 = vmax.f32 %v320, 0.0
  %v387 = vmax.f32 %v323, 0.0
  %v388 = vmax.f32 %v328, 0.0
  %v389 = vmax.f32 %v331, 0.0
  %v390 = vmax.f32 %v336, 0.0
  %v391 = vmax.f32 %v339, 0.0
  %v392 = vmax.f32 %v344, 0.0
  %v393 = vmax.f32 %v347, 0.0
  %v394 = vmax.f32 %v352, 0.0
  %v395 = vmax.f32 %v355, 0.0
  %v396 = vmax.f32 %v360, 0.0
  %v397 = vmax.f32 %v363, 0.0
  %398 = vst [vmem:[%s3] sm:$0xff] %v366
  %399 = vst [vmem:[%s3 + $0x8] sm:$0xff] %v367
  %400 = vst [vmem:[%s3 + $0x10] sm:$0xff] %v368
  %401 = vst [vmem:[%s3 + $0x18] sm:$0xff] %v369
  %402 = vst [vmem:[%s3 + $0x20] sm:$0xff] %v370
  %403 = vst [vmem:[%s3 + $0x28] sm:$0xff] %v371
  %404 = vst [vmem:[%s3 + $0x30] sm:$0xff] %v372
  %405 = vst [vmem:[%s3 + $0x38] sm:$0xff] %v373
  %406 = vst [vmem:[%s3 + $0x40] sm:$0xff] %v374
  %407 = vst [vmem:[%s3 + $0x48] sm:$0xff] %v375
  %408 = vst [vmem:[%s3 + $0x50] sm:$0xff] %v376
  %409 = vst [vmem:[%s3 + $0x58] sm:$0xff] %v377
  %410 = vst [vmem:[%s3 + $0x60] sm:$0xff] %v378
  %411 = vst [vmem:[%s3 + $0x68] sm:$0xff] %v379
  %412 = vst [vmem:[%s3 + $0x70] sm:$0xff] %v380
  %413 = vst [vmem:[%s3 + $0x78] sm:$0xff] %v381
  %414 = vst [vmem:[%s3 + $0x80] sm:$0xff] %v382
  %415 = vst [vmem:[%s3 + $0x88] sm:$0xff] %v383
  %416 = vst [vmem:[%s3 + $0x90] sm:$0xff] %v384
  %417 = vst [vmem:[%s3 + $0x98] sm:$0xff] %v385
  %418 = vst [vmem:[%s3 + $0xa0] sm:$0xff] %v386
  %419 = vst [vmem:[%s3 + $0xa8] sm:$0xff] %v387
  %420 = vst [vmem:[%s3 + $0xb0] sm:$0xff] %v388
  %421 = vst [vmem:[%s3 + $0xb8] sm:$0xff] %v389
  %422 = vst [vmem:[%s3 + $0xc0] sm:$0xff] %v390
  %423 = vst [vmem:[%s3 + $0xc8] sm:$0xff] %v391
  %424 = vst [vmem:[%s3 + $0xd0] sm:$0xff] %v392
  %425 = vst [vmem:[%s3 + $0xd8] sm:$0xff] %v393
  %426 = vst [vmem:[%s3 + $0xe0] sm:$0xff] %v394
  %427 = vst [vmem:[%s3 + $0xe8] sm:$0xff] %v395
  %428 = vst [vmem:[%s3 + $0xf0] sm:$0xff] %v396
  %429 = vst [vmem:[%s3 + $0xf8] sm:$0xff] %v397
  // Predicated region
  $region14: #{_lambda_.6} parent=0 // pred_check
    _
  $region15: #{_lambda_.6} parent=0 // pred_check_branch
    %431 = sbr.rel (0) target = $region17
  $region16: #{_lambda_.6} parent=0 // pred_region
    _
  $region17: #{_lambda_.6} parent=0 // pred_fallthru
    _
  // Predicated region
  $region18: #{_lambda_.6} parent=0 // pred_check
    _
  $region19: #{_lambda_.6} parent=0 // pred_check_branch
    %433 = sbr.rel (0) target = $region21
  $region20: #{_lambda_.6} parent=0 // pred_region
    _
  $region21: #{_lambda_.6} parent=0 // pred_fallthru
    _

// kernel: _lambda_.8
$region0: #{_lambda_.8}
  #allocation0 [shape = 'u32[]', space=smem, size = 0x4, offset = 0x4, fixed_abs, tag = 'smem constant byte address 0x4 - core index']
  #allocation1 [shape = 'u32[144,128]{1,0:T(1,128)}', space=vmem, size = 0x12000, scoped, tag = 'internal scratch']
  %s0 = inlined_call_operand.vmem [shape: bf16[64,144], index: 0, kind: input, shape index: {}]
  %s1 = inlined_call_operand.vmem [shape: bf16[144,128], index: 1, kind: input, shape index: {}]
  %s2 = inlined_call_operand.vmem [shape: f32[1,128], index: 2, kind: input, shape index: {}]
  %s3 = inlined_call_operand.vmem [shape: f32[64,128], index: 3, kind: output, shape index: {}]
  %s4 = sld [smem:[#allocation0]]
  $region22: #{_lambda_.8} parent=0
    _
  %s6 = ssub.s32 1, %s4
  %s7 = scalar_select 0, %s6, %s4
  // Predicated region
  $region2: #{_lambda_.8} parent=0 // pred_check
    _
  $region3: #{_lambda_.8} parent=0 // pred_check_branch
    %9 = sbr.rel (0) target = $region5
  $region4: #{_lambda_.8} parent=0 // pred_region
    _
  $region5: #{_lambda_.8} parent=0 // pred_fallthru
    _
  // Predicated region
  $region6: #{_lambda_.8} parent=0 // pred_check
    _
  $region7: #{_lambda_.8} parent=0 // pred_check_branch
    %11 = sbr.rel (0) target = $region9
  $region8: #{_lambda_.8} parent=0 // pred_region
    _
  $region9: #{_lambda_.8} parent=0 // pred_fallthru
    _
  // Predicated region
  $region10: #{_lambda_.8} parent=0 // pred_check
    _
  $region11: #{_lambda_.8} parent=0 // pred_check_branch
    %13 = sbr.rel (0) target = $region13
  $region12: #{_lambda_.8} parent=0 // pred_region
    _
  $region13: #{_lambda_.8} parent=0 // pred_fallthru
    _
  %v15 = vld [vmem:[%s0] sm:$0xff]
  %v16 = vld [vmem:[%s0 + $0x8] sm:$0xff]
  %v17 = vld [vmem:[%s0 + $0x10] sm:$0xff]
  %v18 = vld [vmem:[%s0 + $0x18] sm:$0xff]
  %v19 = vld [vmem:[%s0 + $0x20] sm:$0xff]
  %v20 = vld [vmem:[%s0 + $0x28] sm:$0xff]
  %v21 = vld [vmem:[%s0 + $0x30] sm:$0xff]
  %v22 = vld [vmem:[%s0 + $0x38] sm:$0xff]
  %v23 = vld [vmem:[%s1] sm:$0xf]
  %v24 = vld [vmem:[%s1 + $0x4] sm:$0xf]
  %v25 = vld [vmem:[%s1 + $0x8] sm:$0xf]
  %v26 = vld [vmem:[%s1 + $0xc] sm:$0xf]
  %v27 = vld [vmem:[%s1 + $0x10] sm:$0xf]
  %v28 = vld [vmem:[%s1 + $0x14] sm:$0xf]
  %v29 = vld [vmem:[%s1 + $0x18] sm:$0xf]
  %v30 = vld [vmem:[%s1 + $0x1c] sm:$0xf]
  %v31 = vld [vmem:[%s1 + $0x20] sm:$0xf]
  %v32 = vld [vmem:[%s1 + $0x24] sm:$0xf]
  %v33 = vld [vmem:[%s1 + $0x28] sm:$0xf]
  %v34 = vld [vmem:[%s1 + $0x2c] sm:$0xf]
  %v35 = vld [vmem:[%s1 + $0x30] sm:$0xf]
  %v36 = vld [vmem:[%s1 + $0x34] sm:$0xf]
  %v37 = vld [vmem:[%s1 + $0x38] sm:$0xf]
  %v38 = vld [vmem:[%s1 + $0x3c] sm:$0xf]
  %v39 = vld [vmem:[%s1 + $0x40] sm:$0xf]
  %v40 = vld [vmem:[%s1 + $0x44] sm:$0xf]
  %v41 = vld [vmem:[%s2] sm:$0x1]
  %v43 = vlaneseq
  %v44 = vshrl.u32 %v43, 7
  %v45 = vsub.s32 0, %v44
  %v46 = vrot.slane %v41, %v45
  %v56 = vunpack.c.l.b16 %v15
  %v57 = vunpack.c.h.b16 %v15
  %v58 = vunpack.c.l.b16 %v16
  %v59 = vunpack.c.h.b16 %v16
  %v60 = vunpack.c.l.b16 %v17
  %v61 = vunpack.c.h.b16 %v17
  %v62 = vunpack.c.l.b16 %v18
  %v63 = vunpack.c.h.b16 %v18
  %v64 = vunpack.c.l.b16 %v19
  %v65 = vunpack.c.h.b16 %v19
  %v66 = vunpack.c.l.b16 %v20
  %v67 = vunpack.c.h.b16 %v20
  %v68 = vunpack.c.l.b16 %v21
  %v69 = vunpack.c.h.b16 %v21
  %v70 = vunpack.c.l.b16 %v22
  %v71 = vunpack.c.h.b16 %v22
  %v72 = vpack.c.b16 %v58, %v56
  %v73 = vpack.c.b16 %v59, %v57
  %v74 = vpack.c.b16 %v62, %v60
  %v75 = vpack.c.b16 %v63, %v61
  %v76 = vpack.c.b16 %v66, %v64
  %v77 = vpack.c.b16 %v67, %v65
  %v78 = vpack.c.b16 %v70, %v68
  %v79 = vpack.c.b16 %v71, %v69
  %v102 = vunpack.c.l.b16 %v23
  %v103 = vunpack.c.l.b16 %v24
  %v104 = vunpack.c.l.b16 %v25
  %v105 = vunpack.c.l.b16 %v26
  %v106 = vunpack.c.l.b16 %v27
  %v107 = vunpack.c.l.b16 %v28
  %v108 = vunpack.c.l.b16 %v29
  %v109 = vunpack.c.l.b16 %v30
  %v110 = vunpack.c.l.b16 %v31
  %v111 = vunpack.c.l.b16 %v32
  %v112 = vunpack.c.l.b16 %v33
  %v113 = vunpack.c.l.b16 %v34
  %v114 = vunpack.c.l.b16 %v35
  %v115 = vunpack.c.l.b16 %v36
  %v116 = vunpack.c.l.b16 %v37
  %v117 = vunpack.c.l.b16 %v38
  %v118 = vunpack.c.l.b16 %v39
  %v119 = vunpack.c.l.b16 %v40
  %v120 = vpack.c.b16 %v103, %v102
  %v121 = vpack.c.b16 %v105, %v104
  %v122 = vpack.c.b16 %v107, %v106
  %v123 = vpack.c.b16 %v109, %v108
  %v124 = vpack.c.b16 %v111, %v110
  %v125 = vpack.c.b16 %v113, %v112
  %v126 = vpack.c.b16 %v115, %v114
  %v127 = vpack.c.b16 %v117, %v116
  %v128 = vpack.c.b16 %v119, %v118
  %vm138 = vcmask 130048
  %v140 = vsel %vm138, %v73, 0
  %v143 = vsel %vm138, %v75, 0
  %v146 = vsel %vm138, %v77, 0
  %v149 = vsel %vm138, %v79, 0
  %151 = vmatprep.subr.bf16.mxu0 0
  %152 = vmatpush1.bf16.msra.mxu0 %v120
  %153 = vmatprep.subr.bf16.mxu0 0
  %154 = vmatpush1.bf16.msra.mxu0 %v121
  %155 = vmatprep.subr.bf16.mxu0 0
  %156 = vmatpush1.bf16.msra.mxu0 %v122
  %157 = vmatprep.subr.bf16.mxu0 0
  %158 = vmatpush1.bf16.msra.mxu0 %v123
  %159 = vmatprep.subr.bf16.mxu0 0
  %160 = vmatpush1.bf16.msra.mxu0 %v124
  %161 = vmatprep.subr.bf16.mxu0 0
  %162 = vmatpush1.bf16.msra.mxu0 %v125
  %163 = vmatprep.subr.bf16.mxu0 0
  %164 = vmatpush1.bf16.msra.mxu0 %v126
  %165 = vmatprep.subr.bf16.mxu0 0
  %166 = vmatpush1.bf16.msra.mxu0 %v127
  %167 = vmatprep.subr.bf16.mxu0 0
  %168 = vmatpush1.bf16.msra.mxu0 %v128
  %169 = vmatprep.subr.bf16.mxu0 0
  %170 = vmatpush1.bf16.msra.mxu0 0
  %171 = vmatprep.subr.bf16.mxu0 0
  %172 = vmatpush1.bf16.msra.mxu0 0
  %173 = vmatprep.subr.bf16.mxu0 0
  %174 = vmatpush1.bf16.msra.mxu0 0
  %175 = vmatprep.subr.bf16.mxu0 0
  %176 = vmatpush1.bf16.msra.mxu0 0
  %177 = vmatprep.subr.bf16.mxu0 0
  %178 = vmatpush1.bf16.msra.mxu0 0
  %179 = vmatprep.subr.bf16.mxu0 0
  %180 = vmatpush1.bf16.msra.mxu0 0
  %181 = vmatprep.subr.bf16.mxu0 0
  %182 = vmatpush1.bf16.msra.mxu0 0
  %183 = vmatprep.mubr.bf16.mxu0 %v140
  %184 = vmatmul.mubr.bf16.gmra.mrb[0].mxu0 %v72
  %v185 = vpop.f32.mrb[0].mxu0
  %v186 = vadd.f32 %v46, %v185
  %v187 = vpop.f32.mrb[0].mxu0
  %v188 = vpop.f32.mrb[0].mxu0
  %v189 = vadd.f32 %v46, %v188
  %v190 = vpop.f32.mrb[0].mxu0
  %191 = vmatprep.mubr.bf16.mxu0 %v143
  %192 = vmatmul.mubr.bf16.gmra.mrb[0].mxu0 %v74
  %v193 = vpop.f32.mrb[0].mxu0
  %v194 = vadd.f32 %v46, %v193
  %v195 = vpop.f32.mrb[0].mxu0
  %v196 = vpop.f32.mrb[0].mxu0
  %v197 = vadd.f32 %v46, %v196
  %v198 = vpop.f32.mrb[0].mxu0
  %199 = vmatprep.mubr.bf16.mxu0 %v146
  %200 = vmatmul.mubr.bf16.gmra.mrb[0].mxu0 %v76
  %v201 = vpop.f32.mrb[0].mxu0
  %v202 = vadd.f32 %v46, %v201
  %v203 = vpop.f32.mrb[0].mxu0
  %v204 = vpop.f32.mrb[0].mxu0
  %v205 = vadd.f32 %v46, %v204
  %v206 = vpop.f32.mrb[0].mxu0
  %207 = vmatprep.mubr.bf16.mxu0 %v149
  %208 = vmatmul.mubr.bf16.gmra.mrb[0].mxu0 %v78
  %v209 = vpop.f32.mrb[0].mxu0
  %v210 = vadd.f32 %v46, %v209
  %v211 = vpop.f32.mrb[0].mxu0
  %v212 = vpop.f32.mrb[0].mxu0
  %v213 = vadd.f32 %v46, %v212
  %v214 = vpop.f32.mrb[0].mxu0
  %215 = vdwg.mxu0
  %v216 = vmax.f32 %v186, 0.0
  %v217 = vmax.f32 %v189, 0.0
  %v218 = vmax.f32 %v194, 0.0
  %v219 = vmax.f32 %v197, 0.0
  %v220 = vmax.f32 %v202, 0.0
  %v221 = vmax.f32 %v205, 0.0
  %v222 = vmax.f32 %v210, 0.0
  %v223 = vmax.f32 %v213, 0.0
  %224 = vst [vmem:[%s3] sm:$0xff] %v216
  %225 = vst [vmem:[%s3 + $0x8] sm:$0xff] %v217
  %226 = vst [vmem:[%s3 + $0x10] sm:$0xff] %v218
  %227 = vst [vmem:[%s3 + $0x18] sm:$0xff] %v219
  %228 = vst [vmem:[%s3 + $0x20] sm:$0xff] %v220
  %229 = vst [vmem:[%s3 + $0x28] sm:$0xff] %v221
  %230 = vst [vmem:[%s3 + $0x30] sm:$0xff] %v222
  %231 = vst [vmem:[%s3 + $0x38] sm:$0xff] %v223
  // Predicated region
  $region14: #{_lambda_.8} parent=0 // pred_check
    _
  $region15: #{_lambda_.8} parent=0 // pred_check_branch
    %233 = sbr.rel (0) target = $region17
  $region16: #{_lambda_.8} parent=0 // pred_region
    _
  $region17: #{_lambda_.8} parent=0 // pred_fallthru
    _
  // Predicated region
  $region18: #{_lambda_.8} parent=0 // pred_check
    _
  $region19: #{_lambda_.8} parent=0 // pred_check_branch
    %235 = sbr.rel (0) target = $region21
  $region20: #{_lambda_.8} parent=0 // pred_region
    _
  $region21: #{_lambda_.8} parent=0 // pred_fallthru
    _

// kernel: _lambda_.9
$region0: #{_lambda_.9}
  #allocation0 [shape = 'u32[]', space=smem, size = 0x4, offset = 0x4, fixed_abs, tag = 'smem constant byte address 0x4 - core index']
  #allocation1 [shape = 'u32[144,128]{1,0:T(1,128)}', space=vmem, size = 0x12000, scoped, tag = 'internal scratch']
  #allocation2 [shape = 'f32[1]{0:T(128)}', space=smem, size = 0x200, scoped, tag = 'scratch operand']
  %s0 = inlined_call_operand.vmem [shape: f32[32,32], index: 0, kind: input, shape index: {}]
  %s1 = inlined_call_operand.vmem [shape: f32[32,32], index: 1, kind: input, shape index: {}]
  %s2 = inlined_call_operand.hbm [shape: f32[1,1], index: 2, kind: output, shape index: {}]
  %s3 = sld [smem:[#allocation0]]
  $region26: #{_lambda_.9} parent=0
    _
  %s5 = ssub.s32 1, %s3
  %s6 = scalar_select 0, %s5, %s3
  $region1: #{_lambda_.9} parent=0
    #allocation3 [shape = 'u8[512]{0}', space=smem, size = 0x200, scoped, tag = 'output window, operand 0, single buffered']
    #allocation4 [shape = 's32[1]{0}', space=sflag, size = 0x4, scoped, tag = 'scoped memory for _lambda_.9']
    %7 = vsyncpa [#allocation4], 0
    // Predicated region
    $region2: #{_lambda_.9} parent=1 // pred_check
      _
    $region3: #{_lambda_.9} parent=1 // pred_check_branch
      %9 = sbr.rel (0) target = $region5
    $region4: #{_lambda_.9} parent=1 // pred_region
      _
    $region5: #{_lambda_.9} parent=1 // pred_fallthru
      _
    // Predicated region
    $region6: #{_lambda_.9} parent=1 // pred_check
      _
    $region7: #{_lambda_.9} parent=1 // pred_check_branch
      %11 = sbr.rel (0) target = $region9
    $region8: #{_lambda_.9} parent=1 // pred_region
      _
    $region9: #{_lambda_.9} parent=1 // pred_fallthru
      _
    %p12 = scmp.eq.s32.totalorder 0, 0
    // Predicated region
    $region10: #{_lambda_.9} parent=1 // pred_check
      %p13 = pneg %p12
    $region11: #{_lambda_.9} parent=1 // pred_check_branch
      %15 = sbr.rel (%p13) target = $region13
    $region12: #{_lambda_.9} parent=1 // pred_region
      %s16 = scalar_lea.smem [#allocation2], 0
      %17 = sst [smem:[%s16]] 0.0
    $region13: #{_lambda_.9} parent=1 // pred_fallthru
      _
    %v18 = vld [vmem:[%s0] sm:$0xff]
    %v19 = vld [vmem:[%s0 + $0x8] sm:$0xff]
    %v20 = vld [vmem:[%s0 + $0x10] sm:$0xff]
    %v21 = vld [vmem:[%s0 + $0x18] sm:$0xff]
    %v22 = vld [vmem:[%s1] sm:$0xff]
    %v23 = vld [vmem:[%s1 + $0x8] sm:$0xff]
    %v24 = vld [vmem:[%s1 + $0x10] sm:$0xff]
    %v25 = vld [vmem:[%s1 + $0x18] sm:$0xff]
    %v26 = vmul.f32 %v18, %v18
    %v27 = vmul.f32 %v19, %v19
    %v28 = vmul.f32 %v20, %v20
    %v29 = vmul.f32 %v21, %v21
    %vm30 = vcmask 261120
    %v31 = vsel %vm30, %v26, 0.0
    %32 = vadd.xlane.f32.xlu0 %v31
    %v33 = vpop.xlane.xlu0 %32
    %v34 = vsel %vm30, %v27, 0.0
    %35 = vadd.xlane.f32.xlu0 %v34
    %v36 = vpop.xlane.xlu0 %35
    %v37 = vsel %vm30, %v28, 0.0
    %38 = vadd.xlane.f32.xlu0 %v37
    %v39 = vpop.xlane.xlu0 %38
    %v40 = vsel %vm30, %v29, 0.0
    %41 = vadd.xlane.f32.xlu0 %v40
    %v42 = vpop.xlane.xlu0 %41
    %v43 = vrsqrt.pop %v33
    %v44 = vmul.f32 %v33, %v43
    %vm45 = vcmp.eq.f32.partialorder %v33, inf
    %v46 = vsel %vm45, %v33, %v44
    %vm47 = vcmp.eq.f32.partialorder %v33, 0.0
    %v48 = vand.u32 %v33, 2147483648
    %v49 = vsel %vm47, %v48, %v46
    %v50 = vrsqrt.pop %v36
    %v51 = vmul.f32 %v36, %v50
    %vm52 = vcmp.eq.f32.partialorder %v36, inf
    %v53 = vsel %vm52, %v36, %v51
    %vm54 = vcmp.eq.f32.partialorder %v36, 0.0
    %v55 = vand.u32 %v36, 2147483648
    %v56 = vsel %vm54, %v55, %v53
    %v57 = vrsqrt.pop %v39
    %v58 = vmul.f32 %v39, %v57
    %vm59 = vcmp.eq.f32.partialorder %v39, inf
    %v60 = vsel %vm59, %v39, %v58
    %vm61 = vcmp.eq.f32.partialorder %v39, 0.0
    %v62 = vand.u32 %v39, 2147483648
    %v63 = vsel %vm61, %v62, %v60
    %v64 = vrsqrt.pop %v42
    %v65 = vmul.f32 %v42, %v64
    %vm66 = vcmp.eq.f32.partialorder %v42, inf
    %v67 = vsel %vm66, %v42, %v65
    %vm68 = vcmp.eq.f32.partialorder %v42, 0.0
    %v69 = vand.u32 %v42, 2147483648
    %v70 = vsel %vm68, %v69, %v67
    %v71 = vmul.f32 %v22, %v22
    %v72 = vmul.f32 %v23, %v23
    %v73 = vmul.f32 %v24, %v24
    %v74 = vmul.f32 %v25, %v25
    %v75 = vsel %vm30, %v71, 0.0
    %76 = vadd.xlane.f32.xlu0 %v75
    %v77 = vpop.xlane.xlu0 %76
    %v78 = vsel %vm30, %v72, 0.0
    %79 = vadd.xlane.f32.xlu0 %v78
    %v80 = vpop.xlane.xlu0 %79
    %v81 = vsel %vm30, %v73, 0.0
    %82 = vadd.xlane.f32.xlu0 %v81
    %v83 = vpop.xlane.xlu0 %82
    %v84 = vsel %vm30, %v74, 0.0
    %85 = vadd.xlane.f32.xlu0 %v84
    %v86 = vpop.xlane.xlu0 %85
    %v87 = vrsqrt.pop %v77
    %v88 = vmul.f32 %v77, %v87
    %vm89 = vcmp.eq.f32.partialorder %v77, inf
    %v90 = vsel %vm89, %v77, %v88
    %vm91 = vcmp.eq.f32.partialorder %v77, 0.0
    %v92 = vand.u32 %v77, 2147483648
    %v93 = vsel %vm91, %v92, %v90
    %v94 = vrsqrt.pop %v80
    %v95 = vmul.f32 %v80, %v94
    %vm96 = vcmp.eq.f32.partialorder %v80, inf
    %v97 = vsel %vm96, %v80, %v95
    %vm98 = vcmp.eq.f32.partialorder %v80, 0.0
    %v99 = vand.u32 %v80, 2147483648
    %v100 = vsel %vm98, %v99, %v97
    %v101 = vrsqrt.pop %v83
    %v102 = vmul.f32 %v83, %v101
    %vm103 = vcmp.eq.f32.partialorder %v83, inf
    %v104 = vsel %vm103, %v83, %v102
    %vm105 = vcmp.eq.f32.partialorder %v83, 0.0
    %v106 = vand.u32 %v83, 2147483648
    %v107 = vsel %vm105, %v106, %v104
    %v108 = vrsqrt.pop %v86
    %v109 = vmul.f32 %v86, %v108
    %vm110 = vcmp.eq.f32.partialorder %v86, inf
    %v111 = vsel %vm110, %v86, %v109
    %vm112 = vcmp.eq.f32.partialorder %v86, 0.0
    %v113 = vand.u32 %v86, 2147483648
    %v114 = vsel %vm112, %v113, %v111
    %v115 = vadd.f32 %v49, 1e-10
    %v116 = vadd.f32 %v56, 1e-10
    %v117 = vadd.f32 %v63, 1e-10
    %v118 = vadd.f32 %v70, 1e-10
    %v119 = vrcp.pop %v115
    %v120 = vmul.f32 %v18, %v119
    %v121 = vrcp.pop %v116
    %v122 = vmul.f32 %v19, %v121
    %v123 = vrcp.pop %v117
    %v124 = vmul.f32 %v20, %v123
    %v125 = vrcp.pop %v118
    %v126 = vmul.f32 %v21, %v125
    %v127 = vadd.f32 %v93, 1e-10
    %v128 = vadd.f32 %v100, 1e-10
    %v129 = vadd.f32 %v107, 1e-10
    %v130 = vadd.f32 %v114, 1e-10
    %v131 = vrcp.pop %v127
    %v132 = vmul.f32 %v22, %v131
    %v133 = vrcp.pop %v128
    %v134 = vmul.f32 %v23, %v133
    %v135 = vrcp.pop %v129
    %v136 = vmul.f32 %v24, %v135
    %v137 = vrcp.pop %v130
    %v138 = vmul.f32 %v25, %v137
    %s139 = sld [smem:[#allocation2]]
    %v140 = vsub.f32 %v120, %v132
    %v141 = vsub.f32 %v122, %v134
    %v142 = vsub.f32 %v124, %v136
    %v143 = vsub.f32 %v126, %v138
    %v144 = vand.u32 2147483647, %v140
    %v145 = vand.u32 2147483647, %v141
    %v146 = vand.u32 2147483647, %v142
    %v147 = vand.u32 2147483647, %v143
    %v148 = vsel %vm30, %v144, 0.0
    %v149 = vsel %vm30, %v145, 0.0
    %v150 = vadd.f32 %v148, %v149
    %v151 = vsel %vm30, %v146, 0.0
    %v152 = vadd.f32 %v150, %v151
    %v153 = vsel %vm30, %v147, 0.0
    %v154 = vadd.f32 %v152, %v153
    %155 = vadd.xlane.f32.xlu0 %v154
    %v156 = vpop.xlane.xlu0 %155
    %v157 = vrot.slane %v156, 4
    %v158 = vadd.f32 %v156, %v157
    %v159 = vrot.slane %v158, 2
    %v160 = vadd.f32 %v158, %v159
    %v161 = vrot.slane %v160, 1
    %v162 = vadd.f32 %v160, %v161
    %s163 = vtos %v162
    %s164 = sadd.f32 %s139, %s163
    %s165 = scalar_lea.smem [#allocation2], 0
    %166 = sst [smem:[%s165]] %s164
    // Predicated region
    $region14: #{_lambda_.9} parent=1 // pred_check
      %p167 = pneg %p12
    $region15: #{_lambda_.9} parent=1 // pred_check_branch
      %169 = sbr.rel (%p167) target = $region17
    $region16: #{_lambda_.9} parent=1 // pred_region
      %s170 = sld [smem:[#allocation2]]
      %s171 = smul.f32 %s170, 0.0009765625
      %s172 = scalar_lea.smem [#allocation3], 0
      %173 = sst [smem:[%s172]] %s171
    $region17: #{_lambda_.9} parent=1 // pred_fallthru
      _
    // Predicated region
    $region18: #{_lambda_.9} parent=1 // pred_check
      _
    $region19: #{_lambda_.9} parent=1 // pred_check_branch
      %175 = sbr.rel (0) target = $region21
    $region20: #{_lambda_.9} parent=1 // pred_region
      %s177 = ssub.s32 16, 16
      %178 = vsyncadd [#allocation4], %s177
      %181 = dma.smem_to_hbm [#allocation3], 16, %s2, [#allocation4]
    $region21: #{_lambda_.9} parent=1 // pred_fallthru
      _
    // Predicated region
    $region22: #{_lambda_.9} parent=1 // pred_check
      _
    $region23: #{_lambda_.9} parent=1 // pred_check_branch
      %183 = sbr.rel (0) target = $region25
    $region24: #{_lambda_.9} parent=1 // pred_region
      %184 = dma.done [#allocation4], 16
    $region25: #{_lambda_.9} parent=1 // pred_fallthru
      _
    %185 = sfence
    %186 = vsyncpa [#allocation4], 1

// kernel: _lambda_.11
$region0: #{_lambda_.11}
  #allocation0 [shape = 'u32[]', space=smem, size = 0x4, offset = 0x4, fixed_abs, tag = 'smem constant byte address 0x4 - core index']
  #allocation1 [shape = 'u32[144,128]{1,0:T(1,128)}', space=vmem, size = 0x12000, scoped, tag = 'internal scratch']
  #allocation2 [shape = 'f32[1]{0:T(128)}', space=smem, size = 0x200, scoped, tag = 'scratch operand']
  %s0 = inlined_call_operand.vmem [shape: f32[8,64], index: 0, kind: input, shape index: {}]
  %s1 = inlined_call_operand.vmem [shape: f32[8,64], index: 1, kind: input, shape index: {}]
  %s2 = inlined_call_operand.hbm [shape: f32[1,1], index: 2, kind: output, shape index: {}]
  %s3 = sld [smem:[#allocation0]]
  $region26: #{_lambda_.11} parent=0
    _
  %s5 = ssub.s32 1, %s3
  %s6 = scalar_select 0, %s5, %s3
  $region1: #{_lambda_.11} parent=0
    #allocation3 [shape = 'u8[512]{0}', space=smem, size = 0x200, scoped, tag = 'output window, operand 0, single buffered']
    #allocation4 [shape = 's32[1]{0}', space=sflag, size = 0x4, scoped, tag = 'scoped memory for _lambda_.11']
    %7 = vsyncpa [#allocation4], 0
    // Predicated region
    $region2: #{_lambda_.11} parent=1 // pred_check
      _
    $region3: #{_lambda_.11} parent=1 // pred_check_branch
      %9 = sbr.rel (0) target = $region5
    $region4: #{_lambda_.11} parent=1 // pred_region
      _
    $region5: #{_lambda_.11} parent=1 // pred_fallthru
      _
    // Predicated region
    $region6: #{_lambda_.11} parent=1 // pred_check
      _
    $region7: #{_lambda_.11} parent=1 // pred_check_branch
      %11 = sbr.rel (0) target = $region9
    $region8: #{_lambda_.11} parent=1 // pred_region
      _
    $region9: #{_lambda_.11} parent=1 // pred_fallthru
      _
    %p12 = scmp.eq.s32.totalorder 0, 0
    // Predicated region
    $region10: #{_lambda_.11} parent=1 // pred_check
      %p13 = pneg %p12
    $region11: #{_lambda_.11} parent=1 // pred_check_branch
      %15 = sbr.rel (%p13) target = $region13
    $region12: #{_lambda_.11} parent=1 // pred_region
      %s16 = scalar_lea.smem [#allocation2], 0
      %17 = sst [smem:[%s16]] 0.0
    $region13: #{_lambda_.11} parent=1 // pred_fallthru
      _
    %v18 = vld [vmem:[%s0] sm:$0xff]
    %v19 = vld [vmem:[%s1] sm:$0xff]
    %v20 = vmul.f32 %v18, %v18
    %vm21 = vcmask 523264
    %v22 = vsel %vm21, %v20, 0.0
    %23 = vadd.xlane.f32.xlu0 %v22
    %v24 = vpop.xlane.xlu0 %23
    %v25 = vrsqrt.pop %v24
    %v26 = vmul.f32 %v24, %v25
    %vm27 = vcmp.eq.f32.partialorder %v24, inf
    %v28 = vsel %vm27, %v24, %v26
    %vm29 = vcmp.eq.f32.partialorder %v24, 0.0
    %v30 = vand.u32 %v24, 2147483648
    %v31 = vsel %vm29, %v30, %v28
    %v32 = vmul.f32 %v19, %v19
    %v33 = vsel %vm21, %v32, 0.0
    %34 = vadd.xlane.f32.xlu0 %v33
    %v35 = vpop.xlane.xlu0 %34
    %v36 = vrsqrt.pop %v35
    %v37 = vmul.f32 %v35, %v36
    %vm38 = vcmp.eq.f32.partialorder %v35, inf
    %v39 = vsel %vm38, %v35, %v37
    %vm40 = vcmp.eq.f32.partialorder %v35, 0.0
    %v41 = vand.u32 %v35, 2147483648
    %v42 = vsel %vm40, %v41, %v39
    %v43 = vadd.f32 %v31, 1e-10
    %v44 = vrcp.pop %v43
    %v45 = vmul.f32 %v18, %v44
    %v46 = vadd.f32 %v42, 1e-10
    %v47 = vrcp.pop %v46
    %v48 = vmul.f32 %v19, %v47
    %s49 = sld [smem:[#allocation2]]
    %v50 = vsub.f32 %v45, %v48
    %v51 = vand.u32 2147483647, %v50
    %v52 = vsel %vm21, %v51, 0.0
    %53 = vadd.xlane.f32.xlu0 %v52
    %v54 = vpop.xlane.xlu0 %53
    %v55 = vrot.slane %v54, 4
    %v56 = vadd.f32 %v54, %v55
    %v57 = vrot.slane %v56, 2
    %v58 = vadd.f32 %v56, %v57
    %v59 = vrot.slane %v58, 1
    %v60 = vadd.f32 %v58, %v59
    %s61 = vtos %v60
    %s62 = sadd.f32 %s49, %s61
    %s63 = scalar_lea.smem [#allocation2], 0
    %64 = sst [smem:[%s63]] %s62
    // Predicated region
    $region14: #{_lambda_.11} parent=1 // pred_check
      %p65 = pneg %p12
    $region15: #{_lambda_.11} parent=1 // pred_check_branch
      %67 = sbr.rel (%p65) target = $region17
    $region16: #{_lambda_.11} parent=1 // pred_region
      %s68 = sld [smem:[#allocation2]]
      %s69 = smul.f32 %s68, 0.001953125
      %s70 = scalar_lea.smem [#allocation3], 0
      %71 = sst [smem:[%s70]] %s69
    $region17: #{_lambda_.11} parent=1 // pred_fallthru
      _
    // Predicated region
    $region18: #{_lambda_.11} parent=1 // pred_check
      _
    $region19: #{_lambda_.11} parent=1 // pred_check_branch
      %73 = sbr.rel (0) target = $region21
    $region20: #{_lambda_.11} parent=1 // pred_region
      %s75 = ssub.s32 16, 16
      %76 = vsyncadd [#allocation4], %s75
      %79 = dma.smem_to_hbm [#allocation3], 16, %s2, [#allocation4]
    $region21: #{_lambda_.11} parent=1 // pred_fallthru
      _
    // Predicated region
    $region22: #{_lambda_.11} parent=1 // pred_check
      _
    $region23: #{_lambda_.11} parent=1 // pred_check_branch
      %81 = sbr.rel (0) target = $region25
    $region24: #{_lambda_.11} parent=1 // pred_region
      %82 = dma.done [#allocation4], 16
    $region25: #{_lambda_.11} parent=1 // pred_fallthru
      _
    %83 = sfence
    %84 = vsyncpa [#allocation4], 1

// kernel: _lambda_.10
$region0: #{_lambda_.10}
  #allocation0 [shape = 'u32[]', space=smem, size = 0x4, offset = 0x4, fixed_abs, tag = 'smem constant byte address 0x4 - core index']
  #allocation1 [shape = 'u32[144,128]{1,0:T(1,128)}', space=vmem, size = 0x12000, scoped, tag = 'internal scratch']
  %s0 = inlined_call_operand.vmem [shape: bf16[16,288], index: 0, kind: input, shape index: {}]
  %s1 = inlined_call_operand.vmem [shape: bf16[288,128], index: 1, kind: input, shape index: {}]
  %s2 = inlined_call_operand.vmem [shape: f32[1,128], index: 2, kind: input, shape index: {}]
  %s3 = inlined_call_operand.vmem [shape: f32[16,128], index: 3, kind: output, shape index: {}]
  %s4 = sld [smem:[#allocation0]]
  $region22: #{_lambda_.10} parent=0
    _
  %s6 = ssub.s32 1, %s4
  %s7 = scalar_select 0, %s6, %s4
  // Predicated region
  $region2: #{_lambda_.10} parent=0 // pred_check
    _
  $region3: #{_lambda_.10} parent=0 // pred_check_branch
    %9 = sbr.rel (0) target = $region5
  $region4: #{_lambda_.10} parent=0 // pred_region
    _
  $region5: #{_lambda_.10} parent=0 // pred_fallthru
    _
  // Predicated region
  $region6: #{_lambda_.10} parent=0 // pred_check
    _
  $region7: #{_lambda_.10} parent=0 // pred_check_branch
    %11 = sbr.rel (0) target = $region9
  $region8: #{_lambda_.10} parent=0 // pred_region
    _
  $region9: #{_lambda_.10} parent=0 // pred_fallthru
    _
  // Predicated region
  $region10: #{_lambda_.10} parent=0 // pred_check
    _
  $region11: #{_lambda_.10} parent=0 // pred_check_branch
    %13 = sbr.rel (0) target = $region13
  $region12: #{_lambda_.10} parent=0 // pred_region
    _
  $region13: #{_lambda_.10} parent=0 // pred_fallthru
    _
  %v15 = vld [vmem:[%s0] sm:$0xff]
  %v16 = vld [vmem:[%s0 + $0x8] sm:$0xf]
  %v17 = vld [vmem:[%s0 + $0xc] sm:$0xff]
  %v18 = vld [vmem:[%s0 + $0x14] sm:$0xf]
  %v19 = vld [vmem:[%s1] sm:$0xf]
  %v20 = vld [vmem:[%s1 + $0x4] sm:$0xf]
  %v21 = vld [vmem:[%s1 + $0x8] sm:$0xf]
  %v22 = vld [vmem:[%s1 + $0xc] sm:$0xf]
  %v23 = vld [vmem:[%s1 + $0x10] sm:$0xf]
  %v24 = vld [vmem:[%s1 + $0x14] sm:$0xf]
  %v25 = vld [vmem:[%s1 + $0x18] sm:$0xf]
  %v26 = vld [vmem:[%s1 + $0x1c] sm:$0xf]
  %v27 = vld [vmem:[%s1 + $0x20] sm:$0xf]
  %v28 = vld [vmem:[%s1 + $0x24] sm:$0xf]
  %v29 = vld [vmem:[%s1 + $0x28] sm:$0xf]
  %v30 = vld [vmem:[%s1 + $0x2c] sm:$0xf]
  %v31 = vld [vmem:[%s1 + $0x30] sm:$0xf]
  %v32 = vld [vmem:[%s1 + $0x34] sm:$0xf]
  %v33 = vld [vmem:[%s1 + $0x38] sm:$0xf]
  %v34 = vld [vmem:[%s1 + $0x3c] sm:$0xf]
  %v35 = vld [vmem:[%s1 + $0x40] sm:$0xf]
  %v36 = vld [vmem:[%s1 + $0x44] sm:$0xf]
  %v37 = vld [vmem:[%s1 + $0x48] sm:$0xf]
  %v38 = vld [vmem:[%s1 + $0x4c] sm:$0xf]
  %v39 = vld [vmem:[%s1 + $0x50] sm:$0xf]
  %v40 = vld [vmem:[%s1 + $0x54] sm:$0xf]
  %v41 = vld [vmem:[%s1 + $0x58] sm:$0xf]
  %v42 = vld [vmem:[%s1 + $0x5c] sm:$0xf]
  %v43 = vld [vmem:[%s1 + $0x60] sm:$0xf]
  %v44 = vld [vmem:[%s1 + $0x64] sm:$0xf]
  %v45 = vld [vmem:[%s1 + $0x68] sm:$0xf]
  %v46 = vld [vmem:[%s1 + $0x6c] sm:$0xf]
  %v47 = vld [vmem:[%s1 + $0x70] sm:$0xf]
  %v48 = vld [vmem:[%s1 + $0x74] sm:$0xf]
  %v49 = vld [vmem:[%s1 + $0x78] sm:$0xf]
  %v50 = vld [vmem:[%s1 + $0x7c] sm:$0xf]
  %v51 = vld [vmem:[%s1 + $0x80] sm:$0xf]
  %v52 = vld [vmem:[%s1 + $0x84] sm:$0xf]
  %v53 = vld [vmem:[%s1 + $0x88] sm:$0xf]
  %v54 = vld [vmem:[%s1 + $0x8c] sm:$0xf]
  %v55 = vld [vmem:[%s2] sm:$0x1]
  %v57 = vlaneseq
  %v58 = vshrl.u32 %v57, 7
  %v59 = vsub.s32 0, %v58
  %v60 = vrot.slane %v55, %v59
  %v66 = vunpack.c.l.b16 %v15
  %v67 = vunpack.c.h.b16 %v15
  %v68 = vunpack.c.l.b16 %v16
  %v69 = vunpack.c.l.b16 %v17
  %v70 = vunpack.c.h.b16 %v17
  %v71 = vunpack.c.l.b16 %v18
  %v72 = vpack.c.b16 %v69, %v66
  %v73 = vpack.c.b16 %v70, %v67
  %v74 = vpack.c.b16 %v71, %v68
  %v113 = vunpack.c.l.b16 %v19
  %v114 = vunpack.c.l.b16 %v20
  %v115 = vunpack.c.l.b16 %v21
  %v116 = vunpack.c.l.b16 %v22
  %v117 = vunpack.c.l.b16 %v23
  %v118 = vunpack.c.l.b16 %v24
  %v119 = vunpack.c.l.b16 %v25
  %v120 = vunpack.c.l.b16 %v26
  %v121 = vunpack.c.l.b16 %v27
  %v122 = vunpack.c.l.b16 %v28
  %v123 = vunpack.c.l.b16 %v29
  %v124 = vunpack.c.l.b16 %v30
  %v125 = vunpack.c.l.b16 %v31
  %v126 = vunpack.c.l.b16 %v32
  %v127 = vunpack.c.l.b16 %v33
  %v128 = vunpack.c.l.b16 %v34
  %v129 = vunpack.c.l.b16 %v35
  %v130 = vunpack.c.l.b16 %v36
  %v131 = vunpack.c.l.b16 %v37
  %v132 = vunpack.c.l.b16 %v38
  %v133 = vunpack.c.l.b16 %v39
  %v134 = vunpack.c.l.b16 %v40
  %v135 = vunpack.c.l.b16 %v41
  %v136 = vunpack.c.l.b16 %v42
  %v137 = vunpack.c.l.b16 %v43
  %v138 = vunpack.c.l.b16 %v44
  %v139 = vunpack.c.l.b16 %v45
  %v140 = vunpack.c.l.b16 %v46
  %v141 = vunpack.c.l.b16 %v47
  %v142 = vunpack.c.l.b16 %v48
  %v143 = vunpack.c.l.b16 %v49
  %v144 = vunpack.c.l.b16 %v50
  %v145 = vunpack.c.l.b16 %v51
  %v146 = vunpack.c.l.b16 %v52
  %v147 = vunpack.c.l.b16 %v53
  %v148 = vunpack.c.l.b16 %v54
  %v149 = vpack.c.b16 %v114, %v113
  %v150 = vpack.c.b16 %v116, %v115
  %v151 = vpack.c.b16 %v118, %v117
  %v152 = vpack.c.b16 %v120, %v119
  %v153 = vpack.c.b16 %v122, %v121
  %v154 = vpack.c.b16 %v124, %v123
  %v155 = vpack.c.b16 %v126, %v125
  %v156 = vpack.c.b16 %v128, %v127
  %v157 = vpack.c.b16 %v130, %v129
  %v158 = vpack.c.b16 %v132, %v131
  %v159 = vpack.c.b16 %v134, %v133
  %v160 = vpack.c.b16 %v136, %v135
  %v161 = vpack.c.b16 %v138, %v137
  %v162 = vpack.c.b16 %v140, %v139
  %v163 = vpack.c.b16 %v142, %v141
  %v164 = vpack.c.b16 %v144, %v143
  %v165 = vpack.c.b16 %v146, %v145
  %v166 = vpack.c.b16 %v148, %v147
  %vm185 = vcmask 261120
  %v187 = vsel %vm185, %v74, 0
  %189 = vmatprep.subr.bf16.mxu0 0
  %190 = vmatpush1.bf16.msra.mxu0 %v149
  %191 = vmatprep.subr.bf16.mxu0 0
  %192 = vmatpush1.bf16.msra.mxu0 %v150
  %193 = vmatprep.subr.bf16.mxu0 0
  %194 = vmatpush1.bf16.msra.mxu0 %v151
  %195 = vmatprep.subr.bf16.mxu0 0
  %196 = vmatpush1.bf16.msra.mxu0 %v152
  %197 = vmatprep.subr.bf16.mxu0 0
  %198 = vmatpush1.bf16.msra.mxu0 %v153
  %199 = vmatprep.subr.bf16.mxu0 0
  %200 = vmatpush1.bf16.msra.mxu0 %v154
  %201 = vmatprep.subr.bf16.mxu0 0
  %202 = vmatpush1.bf16.msra.mxu0 %v155
  %203 = vmatprep.subr.bf16.mxu0 0
  %204 = vmatpush1.bf16.msra.mxu0 %v156
  %205 = vmatprep.subr.bf16.mxu0 0
  %206 = vmatpush1.bf16.msra.mxu0 %v157
  %207 = vmatprep.subr.bf16.mxu0 0
  %208 = vmatpush1.bf16.msra.mxu0 %v158
  %209 = vmatprep.subr.bf16.mxu0 0
  %210 = vmatpush1.bf16.msra.mxu0 %v159
  %211 = vmatprep.subr.bf16.mxu0 0
  %212 = vmatpush1.bf16.msra.mxu0 %v160
  %213 = vmatprep.subr.bf16.mxu0 0
  %214 = vmatpush1.bf16.msra.mxu0 %v161
  %215 = vmatprep.subr.bf16.mxu0 0
  %216 = vmatpush1.bf16.msra.mxu0 %v162
  %217 = vmatprep.subr.bf16.mxu0 0
  %218 = vmatpush1.bf16.msra.mxu0 %v163
  %219 = vmatprep.subr.bf16.mxu0 0
  %220 = vmatpush1.bf16.msra.mxu0 %v164
  %221 = vmatprep.mubr.bf16.mxu0 %v73
  %222 = vmatmul.mubr.bf16.gmra.mrb[0].mxu0 %v72
  %v223 = vpop.f32.mrb[0].mxu0
  %v224 = vadd.f32 %v60, %v223
  %v225 = vpop.f32.mrb[0].mxu0
  %v226 = vpop.f32.mrb[0].mxu0
  %v227 = vadd.f32 %v60, %v226
  %v228 = vpop.f32.mrb[0].mxu0
  %229 = vdwg.mxu0
  %230 = vmatprep.subr.bf16.mxu0 0
  %231 = vmatpush1.bf16.msra.mxu0 %v165
  %232 = vmatprep.subr.bf16.mxu0 0
  %233 = vmatpush1.bf16.msra.mxu0 %v166
  %234 = vmatprep.subr.bf16.mxu0 0
  %235 = vmatpush1.bf16.msra.mxu0 0
  %236 = vmatprep.subr.bf16.mxu0 0
  %237 = vmatpush1.bf16.msra.mxu0 0
  %238 = vmatprep.subr.bf16.mxu0 0
  %239 = vmatpush1.bf16.msra.mxu0 0
  %240 = vmatprep.subr.bf16.mxu0 0
  %241 = vmatpush1.bf16.msra.mxu0 0
  %242 = vmatprep.subr.bf16.mxu0 0
  %243 = vmatpush1.bf16.msra.mxu0 0
  %244 = vmatprep.subr.bf16.mxu0 0
  %245 = vmatpush1.bf16.msra.mxu0 0
  %246 = vmatprep.subr.bf16.mxu0 0
  %247 = vmatpush1.bf16.msra.mxu0 0
  %248 = vmatprep.subr.bf16.mxu0 0
  %249 = vmatpush1.bf16.msra.mxu0 0
  %250 = vmatprep.subr.bf16.mxu0 0
  %251 = vmatpush1.bf16.msra.mxu0 0
  %252 = vmatprep.subr.bf16.mxu0 0
  %253 = vmatpush1.bf16.msra.mxu0 0
  %254 = vmatprep.subr.bf16.mxu0 0
  %255 = vmatpush1.bf16.msra.mxu0 0
  %256 = vmatprep.subr.bf16.mxu0 0
  %257 = vmatpush1.bf16.msra.mxu0 0
  %258 = vmatprep.subr.bf16.mxu0 0
  %259 = vmatpush1.bf16.msra.mxu0 0
  %260 = vmatprep.subr.bf16.mxu0 0
  %261 = vmatpush1.bf16.msra.mxu0 0
  %262 = vmatprep.mubr.bf16.mxu0 0
  %263 = vmatmul.mubr.bf16.gmra.mrb[0].mxu0 %v187
  %v264 = vpop.f32.mrb[0].mxu0
  %v265 = vadd.f32 %v224, %v264
  %v266 = vpop.f32.mrb[0].mxu0
  %v267 = vpop.f32.mrb[0].mxu0
  %v268 = vadd.f32 %v227, %v267
  %v269 = vpop.f32.mrb[0].mxu0
  %270 = vdwg.mxu0
  %v271 = vmax.f32 %v265, 0.0
  %v272 = vmax.f32 %v268, 0.0
  %273 = vst [vmem:[%s3] sm:$0xff] %v271
  %274 = vst [vmem:[%s3 + $0x8] sm:$0xff] %v272
  // Predicated region
  $region14: #{_lambda_.10} parent=0 // pred_check
    _
  $region15: #{_lambda_.10} parent=0 // pred_check_branch
    %276 = sbr.rel (0) target = $region17
  $region16: #{_lambda_.10} parent=0 // pred_region
    _
  $region17: #{_lambda_.10} parent=0 // pred_fallthru
    _
  // Predicated region
  $region18: #{_lambda_.10} parent=0 // pred_check
    _
  $region19: #{_lambda_.10} parent=0 // pred_check_branch
    %278 = sbr.rel (0) target = $region21
  $region20: #{_lambda_.10} parent=0 // pred_region
    _
  $region21: #{_lambda_.10} parent=0 // pred_fallthru
    _

</llo_original>
